<compile_context>
chip_gen: v7x
topology: tpu7x:2x2x1
jax: 0.10.0
libtpu: 0.0.40
codegen_flags: <defaults>
</compile_context>

<pallas_src>
import numpy as np
import jax
import jax.numpy as jnp
from jax import lax
from jax.experimental import pallas as pl
from jax.experimental.pallas import tpu as pltpu


# ---------------------------------------------------------------------------
# Small helpers
# ---------------------------------------------------------------------------
def _round_up(x, m):
    return (x + m - 1) // m * m


def _pad2d(a, rows, cols):
    return jnp.zeros((rows, cols), a.dtype).at[:a.shape[0], :a.shape[1]].set(a)


def _pad_bias_col(b, cpad):
    return jnp.zeros((cpad, 1), jnp.float32).at[:b.shape[0], 0].set(b.astype(jnp.float32))


# ---------------------------------------------------------------------------
# Pallas kernels
# ---------------------------------------------------------------------------
def conv_relu_pool_kernel(p_ref, w_ref, b_ref, o_ref):
    # p_ref: (4*K, TM) bf16  -- im2col patches, 4 pool phases stacked along the K axis.
    # w_ref: (4*Cpad, 4*K) bf16 -- block-diagonal replication of the (Cpad, K) conv weight,
    #                              so the 4 phase matmuls are one MXU pass.
    # b_ref: (Cpad, 1) f32;  o_ref: (Cpad, TM) bf16 (lane-dense: M is the lane axis).
    s = jnp.dot(w_ref[...], p_ref[...], preferred_element_type=jnp.float32)  # (4*Cpad, TM)
    c = o_ref.shape[0]
    m = jnp.maximum(jnp.maximum(s[0:c], s[c:2 * c]),
                    jnp.maximum(s[2 * c:3 * c], s[3 * c:4 * c]))              # 2x2 max-pool
    o_ref[...] = jnp.maximum(m + b_ref[...], 0.0).astype(o_ref.dtype)         # bias + ReLU


def mlp_kernel(x_ref, w1_ref, b1_ref, w2_ref, b2_ref, w3_ref, b3_ref, o_ref):
    # fc1 -> relu -> fc2 -> relu -> fc3, bf16 matmul operands, f32 accumulation/epilogue.
    h = jnp.dot(x_ref[...], w1_ref[...], preferred_element_type=jnp.float32) + b1_ref[...]
    h = jnp.maximum(h, 0.0).astype(jnp.bfloat16)
    h = jnp.dot(h, w2_ref[...], preferred_element_type=jnp.float32) + b2_ref[...]
    h = jnp.maximum(h, 0.0).astype(jnp.bfloat16)
    o_ref[...] = (jnp.dot(h, w3_ref[...], preferred_element_type=jnp.float32)
                  + b3_ref[...]).astype(o_ref.dtype)


# ---------------------------------------------------------------------------
# pallas_call wrappers (grid over the big row/lane dimension, parallel semantics)
# ---------------------------------------------------------------------------
_VMEM_LIMIT = 32 * 1024 * 1024   # explicit scoped-VMEM budget (>= v5e default, == v6e/v7x default)


def _conv_relu_pool(phases_kt, w_bd, b_col, cpad, tm_max=2048):
    # phases_kt: (4*K, M) bf16, w_bd: (4*cpad, 4*K) bf16, b_col: (cpad, 1) f32.
    kk4, m = phases_kt.shape
    tm = min(tm_max, _round_up(m, 128))          # lane tile; tm_max keeps 2x-buffered tiles
    m_pad = _round_up(m, tm)                     # well under v7x's 32 MiB scoped VMEM
    p = jnp.pad(phases_kt, ((0, 0), (0, m_pad - m)))
    out = pl.pallas_call(
        conv_relu_pool_kernel,
        out_shape=jax.ShapeDtypeStruct((cpad, m_pad), jnp.bfloat16),
        grid=(m_pad // tm,),
        in_specs=[
            pl.BlockSpec((kk4, tm), lambda i: (0, i)),          # patch tile (pipelined)
            pl.BlockSpec(w_bd.shape, lambda i: (0, 0)),         # weights resident
            pl.BlockSpec(b_col.shape, lambda i: (0, 0)),        # bias resident
        ],
        out_specs=pl.BlockSpec((cpad, tm), lambda i: (0, i)),
        compiler_params=pltpu.CompilerParams(
            dimension_semantics=("parallel",),                  # megacore split on v7x
            vmem_limit_bytes=_VMEM_LIMIT,
        ),
    )(p, w_bd, b_col)
    return out[:, :m]


def _mlp(x_flat, w1p, b1p, w2p, b2p, w3p, b3p, n_valid, tb_max=512):
    n, d_in = x_flat.shape
    tb = min(tb_max, _round_up(n, 8))
    n_pad = _round_up(n, tb)
    x = jnp.pad(x_flat, ((0, n_pad - n), (0, 0)))
    out = pl.pallas_call(
        mlp_kernel,
        out_shape=jax.ShapeDtypeStruct((n_pad, w3p.shape[1]), jnp.float32),
        grid=(n_pad // tb,),
        in_specs=[
            pl.BlockSpec((tb, d_in), lambda i: (i, 0)),
            pl.BlockSpec(w1p.shape, lambda i: (0, 0)),
            pl.BlockSpec(b1p.shape, lambda i: (0, 0)),
            pl.BlockSpec(w2p.shape, lambda i: (0, 0)),
            pl.BlockSpec(b2p.shape, lambda i: (0, 0)),
            pl.BlockSpec(w3p.shape, lambda i: (0, 0)),
            pl.BlockSpec(b3p.shape, lambda i: (0, 0)),
        ],
        out_specs=pl.BlockSpec((tb, w3p.shape[1]), lambda i: (i, 0)),
        compiler_params=pltpu.CompilerParams(
            dimension_semantics=("parallel",),
            vmem_limit_bytes=_VMEM_LIMIT,
        ),
    )(x, w1p, b1p, w2p, b2p, w3p, b3p)
    return out[:n_valid, :10]


# ---------------------------------------------------------------------------
# Plain-JAX glue (pure index rearrangement, runs in bf16)
# ---------------------------------------------------------------------------
# NOTE: im2col / 2x2-phase split stays as XLA glue: with only 3/6 channels the shifted
# windows are lane-hostile inside a kernel.  bf16 halves the expanded-patch HBM bytes.
def _phase_patches_T(x_nhwc, k):
    """(N,H,W,C) -> (4*k*k*C, N*pH*pW): rows = (phase, kh, kw, c), cols = (n, ph, pw)."""
    n, h, w, c = x_nhwc.shape
    oh, ow = h - k + 1, w - k + 1        # conv output
    ph_, pw_ = oh // 2, ow // 2          # pooled output
    m = n * ph_ * pw_
    phase_blocks = []
    for dh in range(2):
        for dw in range(2):
            rows = []
            for kh in range(k):
                for kw in range(k):
                    h0, w0 = dh + kh, dw + kw
                    sl = x_nhwc[:, h0:h0 + 2 * ph_ - 1:2, w0:w0 + 2 * pw_ - 1:2, :]  # (n,pH,pW,c)
                    rows.append(sl.reshape(m, c).T)                                  # (c, M)
            phase_blocks.append(jnp.concatenate(rows, axis=0))                       # (k*k*c, M)
    return jnp.concatenate(phase_blocks, axis=0)                                     # (4*k*k*c, M)


def _conv_w_blockdiag(w_oihw, cpad):
    """(O,I,K,K) -> (4*cpad, 4*K*K*I) block-diagonal bf16, col order (kh, kw, cin)."""
    o, i, kh, kw = w_oihw.shape
    k2c = kh * kw * i
    wmat = jnp.transpose(w_oihw, (0, 2, 3, 1)).reshape(o, k2c)           # (Cout, K)
    wpad = jnp.zeros((cpad, k2c), wmat.dtype).at[:o, :].set(wmat)        # (Cpad, K)
    blocks = []
    for f in range(4):
        row = [jnp.zeros((cpad, k2c), wmat.dtype)] * 4
        row[f] = wpad
        blocks.append(jnp.concatenate(row, axis=1))
    return jnp.concatenate(blocks, axis=0).astype(jnp.bfloat16)          # (4*Cpad, 4*K)


# ---------------------------------------------------------------------------
# Forward pass (== ConvNet.forward)
# ---------------------------------------------------------------------------
def convnet_forward(x, params):
    (w1, b1, w2, b2, fw1, fb1, fw2, fb2, fw3, fb3) = params
    n = x.shape[0]
    x_nhwc = jnp.transpose(x, (0, 2, 3, 1)).astype(jnp.bfloat16)          # (N,32,32,3)

    # conv1 (3->6, k=5) + ReLU + maxpool(2,2): 32 -> 28 -> 14
    p1 = _phase_patches_T(x_nhwc, 5)                                      # (300, N*196) bf16
    o1 = _conv_relu_pool(p1, _conv_w_blockdiag(w1, 8),
                         _pad_bias_col(b1, 8), cpad=8)                    # (8, N*196) bf16
    h1 = jnp.transpose(o1[:6].reshape(6, n, 14, 14), (1, 2, 3, 0))        # (N,14,14,6)

    # conv2 (6->16, k=5) + ReLU + maxpool(2,2): 14 -> 10 -> 5
    p2 = _phase_patches_T(h1, 5)                                          # (600, N*25) bf16
    o2 = _conv_relu_pool(p2, _conv_w_blockdiag(w2, 16),
                         _pad_bias_col(b2, 16), cpad=16)                  # (16, N*25) bf16

    # x.view(-1, 16*5*5): torch flatten order is (c, h, w); the (Cout, M) layout makes
    # this a plain reshape/transpose in glue.
    flat = jnp.transpose(o2.reshape(16, n, 25), (1, 0, 2)).reshape(n, 16 * 5 * 5)

    # fc1 -> relu -> fc2 -> relu -> fc3 (single fused, row-tiled Pallas kernel).
    w1p = _pad2d(fw1.T, 400, 128).astype(jnp.bfloat16)
    b1p = _pad2d(fb1.reshape(1, -1), 1, 128)
    w2p = _pad2d(fw2.T, 128, 128).astype(jnp.bfloat16)
    b2p = _pad2d(fb2.reshape(1, -1), 1, 128)
    w3p = _pad2d(fw3.T, 128, 128).astype(jnp.bfloat16)
    b3p = _pad2d(fb3.reshape(1, -1), 1, 128)
    return _mlp(flat, w1p, b1p, w2p, b2p, w3p, b3p, n_valid=n)            # (N, 10) f32


# ---------------------------------------------------------------------------
# Pure-JAX reference (for correctness check only)
# ---------------------------------------------------------------------------
def convnet_reference(x, params):
    (w1, b1, w2, b2, fw1, fb1, fw2, fb2, fw3, fb3) = params
    dn = ('NCHW', 'OIHW', 'NCHW')

    def conv(z, w, b):
        y = lax.conv_general_dilated(z, w, (1, 1), 'VALID', dimension_numbers=dn)
        return y + b.reshape(1, -1, 1, 1)

    def pool(z):
        return lax.reduce_window(z, -jnp.inf, lax.max, (1, 1, 2, 2), (1, 1, 2, 2), 'VALID')

    h = pool(jax.nn.relu(conv(x, w1, b1)))
    h = pool(jax.nn.relu(conv(h, w2, b2)))
    h = h.reshape(h.shape[0], -1)
    h = jax.nn.relu(h @ fw1.T + fb1)
    h = jax.nn.relu(h @ fw2.T + fb2)
    return h @ fw3.T + fb3


# ---------------------------------------------------------------------------
# Deterministic parameter init (PyTorch-style uniform(-1/sqrt(fan_in), +))
# ---------------------------------------------------------------------------
def init_params(key):
    def uni(k, shape, fan_in):
        bound = 1.0 / np.sqrt(fan_in)
        return jax.random.uniform(k, shape, jnp.float32, -bound, bound)

    ks = jax.random.split(key, 10)
    w1 = uni(ks[0], (6, 3, 5, 5), 3 * 25)
    b1 = uni(ks[1], (6,), 3 * 25)
    w2 = uni(ks[2], (16, 6, 5, 5), 6 * 25)
    b2 = uni(ks[3], (16,), 6 * 25)
    fw1 = uni(ks[4], (120, 400), 400)
    fb1 = uni(ks[5], (120,), 400)
    fw2 = uni(ks[6], (84, 120), 120)
    fb2 = uni(ks[7], (84,), 120)
    fw3 = uni(ks[8], (10, 84), 84)
    fb3 = uni(ks[9], (10,), 84)
    return (w1, b1, w2, b2, fw1, fb1, fw2, fb2, fw3, fb3)


if __name__ == "__main__":
    key = jax.random.PRNGKey(0)
    pkey, xkey = jax.random.split(key)
    params = init_params(pkey)
    # The module's fc1 = Linear(16*5*5, ...) forces 3x32x32 inputs; batch kept small.
    x = jax.random.normal(xkey, (2, 3, 32, 32), jnp.float32)

    out = jax.jit(convnet_forward)(x, params)
    out = jax.block_until_ready(out)
    assert out.shape == (2, 10), out.shape

    ref = convnet_reference(x, params)
    # bf16 matmul operands with f32 accumulation (per perf review) => modest tolerance.
    np.testing.assert_allclose(np.asarray(out), np.asarray(ref), atol=2e-2, rtol=2e-2)

    print("KERNEL_OK")
</pallas_src>

<mosaic_0001>
module attributes {stable_mosaic.version = 11 : i64} {
  func.func @conv_relu_pool_kernel(%arg0: i32, %arg1: memref<300x512xbf16, #tpu.memory_space<vmem>>, %arg2: memref<32x300xbf16, #tpu.memory_space<vmem>>, %arg3: memref<8x1xf32, #tpu.memory_space<vmem>>, %arg4: memref<8x512xbf16, #tpu.memory_space<vmem>>) attributes {dimension_semantics = [#tpu.dimension_semantics<parallel>], iteration_bounds = array<i64: 1>, scalar_prefetch = 0 : i64, scratch_operands = 0 : i64, tpu.core_type = #tpu.core_type<tc>, window_params = [{transform_indices = @transform_0, window_bounds = array<i64: 300, 512>}, {pipeline_mode = #tpu.pipeline_mode<synchronous>, transform_indices = @transform_1, window_bounds = array<i64: 32, 300>}, {pipeline_mode = #tpu.pipeline_mode<synchronous>, transform_indices = @transform_2, window_bounds = array<i64: 8, 1>}, {transform_indices = @transform_3, window_bounds = array<i64: 8, 512>}]} {
    %c0 = arith.constant 0 : index
    %c0_0 = arith.constant 0 : index
    %0 = vector.load %arg2[%c0, %c0_0] : memref<32x300xbf16, #tpu.memory_space<vmem>>, vector<32x300xbf16>
    %c0_1 = arith.constant 0 : index
    %c0_2 = arith.constant 0 : index
    %1 = vector.load %arg1[%c0_1, %c0_2] : memref<300x512xbf16, #tpu.memory_space<vmem>>, vector<300x512xbf16>
    %cst = arith.constant dense<0.000000e+00> : vector<32x512xf32>
    %2 = tpu.matmul %0, %1, %cst {dimension_numbers = #tpu.dot_dimension_numbers<[1], [0], [0], [1], [0, 0, 1, 1], [], []>} : vector<32x300xbf16>, vector<300x512xbf16>, vector<32x512xf32> -> vector<32x512xf32>
    %3 = vector.extract_strided_slice %2 {offsets = [0, 0], sizes = [8, 512], strides = [1, 1]} : vector<32x512xf32> to vector<8x512xf32>
    %4 = vector.extract_strided_slice %2 {offsets = [8, 0], sizes = [8, 512], strides = [1, 1]} : vector<32x512xf32> to vector<8x512xf32>
    %5 = arith.maximumf %3, %4 : vector<8x512xf32>
    %6 = vector.extract_strided_slice %2 {offsets = [16, 0], sizes = [8, 512], strides = [1, 1]} : vector<32x512xf32> to vector<8x512xf32>
    %7 = vector.extract_strided_slice %2 {offsets = [24, 0], sizes = [8, 512], strides = [1, 1]} : vector<32x512xf32> to vector<8x512xf32>
    %8 = arith.maximumf %6, %7 : vector<8x512xf32>
    %9 = arith.maximumf %5, %8 : vector<8x512xf32>
    %c0_3 = arith.constant 0 : index
    %c0_4 = arith.constant 0 : index
    %10 = vector.load %arg3[%c0_3, %c0_4] : memref<8x1xf32, #tpu.memory_space<vmem>>, vector<8x1xf32>
    %11 = vector.broadcast %10 : vector<8x1xf32> to vector<8x512xf32>
    %12 = arith.addf %9, %11 : vector<8x512xf32>
    %cst_5 = arith.constant 0.000000e+00 : f32
    %13 = vector.broadcast %cst_5 : f32 to vector<8x512xf32>
    %14 = arith.maximumf %12, %13 : vector<8x512xf32>
    %15 = arith.truncf %14 : vector<8x512xf32> to vector<8x512xbf16>
    %c0_6 = arith.constant 0 : index
    %c0_7 = arith.constant 0 : index
    %16 = vector.load %arg4[%c0_6, %c0_7] : memref<8x512xbf16, #tpu.memory_space<vmem>>, vector<8x512xbf16>
    tpu.vector_store %arg4[%c0_6, %c0_7], %15 {strides = array<i32>} : memref<8x512xbf16, #tpu.memory_space<vmem>>, vector<8x512xbf16>,
    return
  }
  func.func @transform_0(%arg0: i32) -> (i32, i32) {
    %c0_i32 = arith.constant 0 : i32
    %c0_i32_0 = arith.constant 0 : i32
    return %c0_i32, %arg0 : i32, i32
  }
  func.func @transform_1(%arg0: i32) -> (i32, i32) {
    %c0_i32 = arith.constant 0 : i32
    %c0_i32_0 = arith.constant 0 : i32
    %c0_i32_1 = arith.constant 0 : i32
    return %c0_i32, %c0_i32_0 : i32, i32
  }
  func.func @transform_2(%arg0: i32) -> (i32, i32) {
    %c0_i32 = arith.constant 0 : i32
    %c0_i32_0 = arith.constant 0 : i32
    %c0_i32_1 = arith.constant 0 : i32
    return %c0_i32, %c0_i32_0 : i32, i32
  }
  func.func @transform_3(%arg0: i32) -> (i32, i32) {
    %c0_i32 = arith.constant 0 : i32
    %c0_i32_0 = arith.constant 0 : i32
    return %c0_i32, %arg0 : i32, i32
  }
}

module attributes {stable_mosaic.version = 11 : i64} {
  func.func @conv_relu_pool_kernel(%arg0: i32, %arg1: memref<600x128xbf16, #tpu.memory_space<vmem>>, %arg2: memref<64x600xbf16, #tpu.memory_space<vmem>>, %arg3: memref<16x1xf32, #tpu.memory_space<vmem>>, %arg4: memref<16x128xbf16, #tpu.memory_space<vmem>>) attributes {dimension_semantics = [#tpu.dimension_semantics<parallel>], iteration_bounds = array<i64: 1>, scalar_prefetch = 0 : i64, scratch_operands = 0 : i64, tpu.core_type = #tpu.core_type<tc>, window_params = [{transform_indices = @transform_0, window_bounds = array<i64: 600, 128>}, {pipeline_mode = #tpu.pipeline_mode<synchronous>, transform_indices = @transform_1, window_bounds = array<i64: 64, 600>}, {pipeline_mode = #tpu.pipeline_mode<synchronous>, transform_indices = @transform_2, window_bounds = array<i64: 16, 1>}, {transform_indices = @transform_3, window_bounds = array<i64: 16, 128>}]} {
    %c0 = arith.constant 0 : index
    %c0_0 = arith.constant 0 : index
    %0 = vector.load %arg2[%c0, %c0_0] : memref<64x600xbf16, #tpu.memory_space<vmem>>, vector<64x600xbf16>
    %c0_1 = arith.constant 0 : index
    %c0_2 = arith.constant 0 : index
    %1 = vector.load %arg1[%c0_1, %c0_2] : memref<600x128xbf16, #tpu.memory_space<vmem>>, vector<600x128xbf16>
    %cst = arith.constant dense<0.000000e+00> : vector<64x128xf32>
    %2 = tpu.matmul %0, %1, %cst {dimension_numbers = #tpu.dot_dimension_numbers<[1], [0], [0], [1], [0, 0, 1, 1], [], []>} : vector<64x600xbf16>, vector<600x128xbf16>, vector<64x128xf32> -> vector<64x128xf32>
    %3 = vector.extract_strided_slice %2 {offsets = [0, 0], sizes = [16, 128], strides = [1, 1]} : vector<64x128xf32> to vector<16x128xf32>
    %4 = vector.extract_strided_slice %2 {offsets = [16, 0], sizes = [16, 128], strides = [1, 1]} : vector<64x128xf32> to vector<16x128xf32>
    %5 = arith.maximumf %3, %4 : vector<16x128xf32>
    %6 = vector.extract_strided_slice %2 {offsets = [32, 0], sizes = [16, 128], strides = [1, 1]} : vector<64x128xf32> to vector<16x128xf32>
    %7 = vector.extract_strided_slice %2 {offsets = [48, 0], sizes = [16, 128], strides = [1, 1]} : vector<64x128xf32> to vector<16x128xf32>
    %8 = arith.maximumf %6, %7 : vector<16x128xf32>
    %9 = arith.maximumf %5, %8 : vector<16x128xf32>
    %c0_3 = arith.constant 0 : index
    %c0_4 = arith.constant 0 : index
    %10 = vector.load %arg3[%c0_3, %c0_4] : memref<16x1xf32, #tpu.memory_space<vmem>>, vector<16x1xf32>
    %11 = vector.broadcast %10 : vector<16x1xf32> to vector<16x128xf32>
    %12 = arith.addf %9, %11 : vector<16x128xf32>
    %cst_5 = arith.constant 0.000000e+00 : f32
    %13 = vector.broadcast %cst_5 : f32 to vector<16x128xf32>
    %14 = arith.maximumf %12, %13 : vector<16x128xf32>
    %15 = arith.truncf %14 : vector<16x128xf32> to vector<16x128xbf16>
    %c0_6 = arith.constant 0 : index
    %c0_7 = arith.constant 0 : index
    %16 = vector.load %arg4[%c0_6, %c0_7] : memref<16x128xbf16, #tpu.memory_space<vmem>>, vector<16x128xbf16>
    tpu.vector_store %arg4[%c0_6, %c0_7], %15 {strides = array<i32>} : memref<16x128xbf16, #tpu.memory_space<vmem>>, vector<16x128xbf16>,
    return
  }
  func.func @transform_0(%arg0: i32) -> (i32, i32) {
    %c0_i32 = arith.constant 0 : i32
    %c0_i32_0 = arith.constant 0 : i32
    return %c0_i32, %arg0 : i32, i32
  }
  func.func @transform_1(%arg0: i32) -> (i32, i32) {
    %c0_i32 = arith.constant 0 : i32
    %c0_i32_0 = arith.constant 0 : i32
    %c0_i32_1 = arith.constant 0 : i32
    return %c0_i32, %c0_i32_0 : i32, i32
  }
  func.func @transform_2(%arg0: i32) -> (i32, i32) {
    %c0_i32 = arith.constant 0 : i32
    %c0_i32_0 = arith.constant 0 : i32
    %c0_i32_1 = arith.constant 0 : i32
    return %c0_i32, %c0_i32_0 : i32, i32
  }
  func.func @transform_3(%arg0: i32) -> (i32, i32) {
    %c0_i32 = arith.constant 0 : i32
    %c0_i32_0 = arith.constant 0 : i32
    return %c0_i32, %arg0 : i32, i32
  }
}

module attributes {stable_mosaic.version = 11 : i64} {
  func.func @mlp_kernel(%arg0: i32, %arg1: memref<8x400xbf16, #tpu.memory_space<vmem>>, %arg2: memref<400x128xbf16, #tpu.memory_space<vmem>>, %arg3: memref<1x128xf32, #tpu.memory_space<vmem>>, %arg4: memref<128x128xbf16, #tpu.memory_space<vmem>>, %arg5: memref<1x128xf32, #tpu.memory_space<vmem>>, %arg6: memref<128x128xbf16, #tpu.memory_space<vmem>>, %arg7: memref<1x128xf32, #tpu.memory_space<vmem>>, %arg8: memref<8x128xf32, #tpu.memory_space<vmem>>) attributes {dimension_semantics = [#tpu.dimension_semantics<parallel>], iteration_bounds = array<i64: 1>, scalar_prefetch = 0 : i64, scratch_operands = 0 : i64, tpu.core_type = #tpu.core_type<tc>, window_params = [{transform_indices = @transform_0, window_bounds = array<i64: 8, 400>}, {pipeline_mode = #tpu.pipeline_mode<synchronous>, transform_indices = @transform_1, window_bounds = array<i64: 400, 128>}, {pipeline_mode = #tpu.pipeline_mode<synchronous>, transform_indices = @transform_2, window_bounds = array<i64: 1, 128>}, {pipeline_mode = #tpu.pipeline_mode<synchronous>, transform_indices = @transform_3, window_bounds = array<i64: 128, 128>}, {pipeline_mode = #tpu.pipeline_mode<synchronous>, transform_indices = @transform_4, window_bounds = array<i64: 1, 128>}, {pipeline_mode = #tpu.pipeline_mode<synchronous>, transform_indices = @transform_5, window_bounds = array<i64: 128, 128>}, {pipeline_mode = #tpu.pipeline_mode<synchronous>, transform_indices = @transform_6, window_bounds = array<i64: 1, 128>}, {transform_indices = @transform_7, window_bounds = array<i64: 8, 128>}]} {
    %c0 = arith.constant 0 : index
    %c0_0 = arith.constant 0 : index
    %0 = vector.load %arg1[%c0, %c0_0] : memref<8x400xbf16, #tpu.memory_space<vmem>>, vector<8x400xbf16>
    %c0_1 = arith.constant 0 : index
    %c0_2 = arith.constant 0 : index
    %1 = vector.load %arg2[%c0_1, %c0_2] : memref<400x128xbf16, #tpu.memory_space<vmem>>, vector<400x128xbf16>
    %cst = arith.constant dense<0.000000e+00> : vector<8x128xf32>
    %2 = tpu.matmul %0, %1, %cst {dimension_numbers = #tpu.dot_dimension_numbers<[1], [0], [0], [1], [0, 0, 1, 1], [], []>} : vector<8x400xbf16>, vector<400x128xbf16>, vector<8x128xf32> -> vector<8x128xf32>
    %c0_3 = arith.constant 0 : index
    %c0_4 = arith.constant 0 : index
    %3 = vector.load %arg3[%c0_3, %c0_4] : memref<1x128xf32, #tpu.memory_space<vmem>>, vector<1x128xf32>
    %4 = vector.broadcast %3 : vector<1x128xf32> to vector<8x128xf32>
    %5 = arith.addf %2, %4 : vector<8x128xf32>
    %cst_5 = arith.constant 0.000000e+00 : f32
    %6 = vector.broadcast %cst_5 : f32 to vector<8x128xf32>
    %7 = arith.maximumf %5, %6 : vector<8x128xf32>
    %8 = arith.truncf %7 : vector<8x128xf32> to vector<8x128xbf16>
    %c0_6 = arith.constant 0 : index
    %c0_7 = arith.constant 0 : index
    %9 = vector.load %arg4[%c0_6, %c0_7] : memref<128x128xbf16, #tpu.memory_space<vmem>>, vector<128x128xbf16>
    %cst_8 = arith.constant dense<0.000000e+00> : vector<8x128xf32>
    %10 = tpu.matmul %8, %9, %cst_8 {dimension_numbers = #tpu.dot_dimension_numbers<[1], [0], [0], [1], [0, 0, 1, 1], [], []>} : vector<8x128xbf16>, vector<128x128xbf16>, vector<8x128xf32> -> vector<8x128xf32>
    %c0_9 = arith.constant 0 : index
    %c0_10 = arith.constant 0 : index
    %11 = vector.load %arg5[%c0_9, %c0_10] : memref<1x128xf32, #tpu.memory_space<vmem>>, vector<1x128xf32>
    %12 = vector.broadcast %11 : vector<1x128xf32> to vector<8x128xf32>
    %13 = arith.addf %10, %12 : vector<8x128xf32>
    %cst_11 = arith.constant 0.000000e+00 : f32
    %14 = vector.broadcast %cst_11 : f32 to vector<8x128xf32>
    %15 = arith.maximumf %13, %14 : vector<8x128xf32>
    %16 = arith.truncf %15 : vector<8x128xf32> to vector<8x128xbf16>
    %c0_12 = arith.constant 0 : index
    %c0_13 = arith.constant 0 : index
    %17 = vector.load %arg6[%c0_12, %c0_13] : memref<128x128xbf16, #tpu.memory_space<vmem>>, vector<128x128xbf16>
    %cst_14 = arith.constant dense<0.000000e+00> : vector<8x128xf32>
    %18 = tpu.matmul %16, %17, %cst_14 {dimension_numbers = #tpu.dot_dimension_numbers<[1], [0], [0], [1], [0, 0, 1, 1], [], []>} : vector<8x128xbf16>, vector<128x128xbf16>, vector<8x128xf32> -> vector<8x128xf32>
    %c0_15 = arith.constant 0 : index
    %c0_16 = arith.constant 0 : index
    %19 = vector.load %arg7[%c0_15, %c0_16] : memref<1x128xf32, #tpu.memory_space<vmem>>, vector<1x128xf32>
    %20 = vector.broadcast %19 : vector<1x128xf32> to vector<8x128xf32>
    %21 = arith.addf %18, %20 : vector<8x128xf32>
    %c0_17 = arith.constant 0 : index
    %c0_18 = arith.constant 0 : index
    %22 = vector.load %arg8[%c0_17, %c0_18] : memref<8x128xf32, #tpu.memory_space<vmem>>, vector<8x128xf32>
    tpu.vector_store %arg8[%c0_17, %c0_18], %21 {strides = array<i32>} : memref<8x128xf32, #tpu.memory_space<vmem>>, vector<8x128xf32>,
    return
  }
  func.func @transform_0(%arg0: i32) -> (i32, i32) {
    %c0_i32 = arith.constant 0 : i32
    %c0_i32_0 = arith.constant 0 : i32
    return %arg0, %c0_i32 : i32, i32
  }
  func.func @transform_1(%arg0: i32) -> (i32, i32) {
    %c0_i32 = arith.constant 0 : i32
    %c0_i32_0 = arith.constant 0 : i32
    %c0_i32_1 = arith.constant 0 : i32
    return %c0_i32, %c0_i32_0 : i32, i32
  }
  func.func @transform_2(%arg0: i32) -> (i32, i32) {
    %c0_i32 = arith.constant 0 : i32
    %c0_i32_0 = arith.constant 0 : i32
    %c0_i32_1 = arith.constant 0 : i32
    return %c0_i32, %c0_i32_0 : i32, i32
  }
  func.func @transform_3(%arg0: i32) -> (i32, i32) {
    %c0_i32 = arith.constant 0 : i32
    %c0_i32_0 = arith.constant 0 : i32
    %c0_i32_1 = arith.constant 0 : i32
    return %c0_i32, %c0_i32_0 : i32, i32
  }
  func.func @transform_4(%arg0: i32) -> (i32, i32) {
    %c0_i32 = arith.constant 0 : i32
    %c0_i32_0 = arith.constant 0 : i32
    %c0_i32_1 = arith.constant 0 : i32
    return %c0_i32, %c0_i32_0 : i32, i32
  }
  func.func @transform_5(%arg0: i32) -> (i32, i32) {
    %c0_i32 = arith.constant 0 : i32
    %c0_i32_0 = arith.constant 0 : i32
    %c0_i32_1 = arith.constant 0 : i32
    return %c0_i32, %c0_i32_0 : i32, i32
  }
  func.func @transform_6(%arg0: i32) -> (i32, i32) {
    %c0_i32 = arith.constant 0 : i32
    %c0_i32_0 = arith.constant 0 : i32
    %c0_i32_1 = arith.constant 0 : i32
    return %c0_i32, %c0_i32_0 : i32, i32
  }
  func.func @transform_7(%arg0: i32) -> (i32, i32) {
    %c0_i32 = arith.constant 0 : i32
    %c0_i32_0 = arith.constant 0 : i32
    return %arg0, %c0_i32 : i32, i32
  }
}

</mosaic_0001>

<llo_original>
// kernel: convnet_forward.3
$region0: #{convnet_forward.3}
  #allocation0 [shape = 'u32[]', space=smem, size = 0x4, offset = 0x4, fixed_abs, tag = 'smem constant byte address 0x4 - core index']
  #allocation1 [shape = 'u32[144,128]{1,0:T(1,128)}', space=vmem, size = 0x12000, scoped, tag = 'internal scratch']
  %s0 = inlined_call_operand.vmem [shape: bf16[300,512], index: 0, kind: input, shape index: {}]
  %s1 = inlined_call_operand.vmem [shape: bf16[32,300], index: 1, kind: input, shape index: {}]
  %s2 = inlined_call_operand.vmem [shape: f32[8,1], index: 2, kind: input, shape index: {}]
  %s3 = inlined_call_operand.vmem [shape: bf16[8,512], index: 3, kind: output, shape index: {}]
  %s4 = sld [smem:[#allocation0]]
  $region22: #{convnet_forward.3} parent=0
    _
  %s6 = ssub.s32 1, %s4
  %s7 = scalar_select 0, %s6, %s4
  // Predicated region
  $region2: #{convnet_forward.3} parent=0 // pred_check
    _
  $region3: #{convnet_forward.3} parent=0 // pred_check_branch
    %9 = sbr.rel (0) target = $region5
  $region4: #{convnet_forward.3} parent=0 // pred_region
    _
  $region5: #{convnet_forward.3} parent=0 // pred_fallthru
    _
  // Predicated region
  $region6: #{convnet_forward.3} parent=0 // pred_check
    _
  $region7: #{convnet_forward.3} parent=0 // pred_check_branch
    %11 = sbr.rel (0) target = $region9
  $region8: #{convnet_forward.3} parent=0 // pred_region
    _
  $region9: #{convnet_forward.3} parent=0 // pred_fallthru
    _
  // Predicated region
  $region10: #{convnet_forward.3} parent=0 // pred_check
    _
  $region11: #{convnet_forward.3} parent=0 // pred_check_branch
    %13 = sbr.rel (0) target = $region13
  $region12: #{convnet_forward.3} parent=0 // pred_region
    _
  $region13: #{convnet_forward.3} parent=0 // pred_fallthru
    _
  %v15 = vld [vmem:[%s1] sm:$0xff]
  %v16 = vld [vmem:[%s1 + $0x8] sm:$0xf]
  %v17 = vld [vmem:[%s1 + $0xc] sm:$0xff]
  %v18 = vld [vmem:[%s1 + $0x14] sm:$0xf]
  %v19 = vld [vmem:[%s1 + $0x18] sm:$0xff]
  %v20 = vld [vmem:[%s1 + $0x20] sm:$0xf]
  %v21 = vld [vmem:[%s1 + $0x24] sm:$0xff]
  %v22 = vld [vmem:[%s1 + $0x2c] sm:$0xf]
  %v23 = vld [vmem:[%s0] sm:$0xff]
  %v24 = vld [vmem:[%s0 + $0x8] sm:$0xff]
  %v25 = vld [vmem:[%s0 + $0x10] sm:$0xff]
  %v26 = vld [vmem:[%s0 + $0x18] sm:$0xff]
  %v27 = vld [vmem:[%s0 + $0x20] sm:$0xff]
  %v28 = vld [vmem:[%s0 + $0x28] sm:$0xff]
  %v29 = vld [vmem:[%s0 + $0x30] sm:$0xff]
  %v30 = vld [vmem:[%s0 + $0x38] sm:$0xff]
  %v31 = vld [vmem:[%s0 + $0x40] sm:$0xff]
  %v32 = vld [vmem:[%s0 + $0x48] sm:$0xff]
  %v33 = vld [vmem:[%s0 + $0x50] sm:$0xff]
  %v34 = vld [vmem:[%s0 + $0x58] sm:$0xff]
  %v35 = vld [vmem:[%s0 + $0x60] sm:$0xff]
  %v36 = vld [vmem:[%s0 + $0x68] sm:$0xff]
  %v37 = vld [vmem:[%s0 + $0x70] sm:$0xff]
  %v38 = vld [vmem:[%s0 + $0x78] sm:$0xff]
  %v39 = vld [vmem:[%s0 + $0x80] sm:$0xff]
  %v40 = vld [vmem:[%s0 + $0x88] sm:$0xff]
  %v41 = vld [vmem:[%s0 + $0x90] sm:$0xff]
  %v42 = vld [vmem:[%s0 + $0x98] sm:$0xff]
  %v43 = vld [vmem:[%s0 + $0xa0] sm:$0xff]
  %v44 = vld [vmem:[%s0 + $0xa8] sm:$0xff]
  %v45 = vld [vmem:[%s0 + $0xb0] sm:$0xff]
  %v46 = vld [vmem:[%s0 + $0xb8] sm:$0xff]
  %v47 = vld [vmem:[%s0 + $0xc0] sm:$0xff]
  %v48 = vld [vmem:[%s0 + $0xc8] sm:$0xff]
  %v49 = vld [vmem:[%s0 + $0xd0] sm:$0xff]
  %v50 = vld [vmem:[%s0 + $0xd8] sm:$0xff]
  %v51 = vld [vmem:[%s0 + $0xe0] sm:$0xff]
  %v52 = vld [vmem:[%s0 + $0xe8] sm:$0xff]
  %v53 = vld [vmem:[%s0 + $0xf0] sm:$0xff]
  %v54 = vld [vmem:[%s0 + $0xf8] sm:$0xff]
  %v55 = vld [vmem:[%s0 + $0x100] sm:$0xff]
  %v56 = vld [vmem:[%s0 + $0x108] sm:$0xff]
  %v57 = vld [vmem:[%s0 + $0x110] sm:$0xff]
  %v58 = vld [vmem:[%s0 + $0x118] sm:$0xff]
  %v59 = vld [vmem:[%s0 + $0x120] sm:$0xff]
  %v60 = vld [vmem:[%s0 + $0x128] sm:$0xff]
  %v61 = vld [vmem:[%s0 + $0x130] sm:$0xff]
  %v62 = vld [vmem:[%s0 + $0x138] sm:$0xff]
  %v63 = vld [vmem:[%s0 + $0x140] sm:$0xff]
  %v64 = vld [vmem:[%s0 + $0x148] sm:$0xff]
  %v65 = vld [vmem:[%s0 + $0x150] sm:$0xff]
  %v66 = vld [vmem:[%s0 + $0x158] sm:$0xff]
  %v67 = vld [vmem:[%s0 + $0x160] sm:$0xff]
  %v68 = vld [vmem:[%s0 + $0x168] sm:$0xff]
  %v69 = vld [vmem:[%s0 + $0x170] sm:$0xff]
  %v70 = vld [vmem:[%s0 + $0x178] sm:$0xff]
  %v71 = vld [vmem:[%s0 + $0x180] sm:$0xff]
  %v72 = vld [vmem:[%s0 + $0x188] sm:$0xff]
  %v73 = vld [vmem:[%s0 + $0x190] sm:$0xff]
  %v74 = vld [vmem:[%s0 + $0x198] sm:$0xff]
  %v75 = vld [vmem:[%s0 + $0x1a0] sm:$0xff]
  %v76 = vld [vmem:[%s0 + $0x1a8] sm:$0xff]
  %v77 = vld [vmem:[%s0 + $0x1b0] sm:$0xff]
  %v78 = vld [vmem:[%s0 + $0x1b8] sm:$0xff]
  %v79 = vld [vmem:[%s0 + $0x1c0] sm:$0xff]
  %v80 = vld [vmem:[%s0 + $0x1c8] sm:$0xff]
  %v81 = vld [vmem:[%s0 + $0x1d0] sm:$0xff]
  %v82 = vld [vmem:[%s0 + $0x1d8] sm:$0xff]
  %v83 = vld [vmem:[%s0 + $0x1e0] sm:$0xff]
  %v84 = vld [vmem:[%s0 + $0x1e8] sm:$0xff]
  %v85 = vld [vmem:[%s0 + $0x1f0] sm:$0xff]
  %v86 = vld [vmem:[%s0 + $0x1f8] sm:$0xff]
  %v87 = vld [vmem:[%s0 + $0x200] sm:$0xff]
  %v88 = vld [vmem:[%s0 + $0x208] sm:$0xff]
  %v89 = vld [vmem:[%s0 + $0x210] sm:$0xff]
  %v90 = vld [vmem:[%s0 + $0x218] sm:$0xff]
  %v91 = vld [vmem:[%s0 + $0x220] sm:$0xff]
  %v92 = vld [vmem:[%s0 + $0x228] sm:$0xff]
  %v93 = vld [vmem:[%s0 + $0x230] sm:$0xff]
  %v94 = vld [vmem:[%s0 + $0x238] sm:$0xff]
  %v95 = vld [vmem:[%s0 + $0x240] sm:$0xff]
  %v96 = vld [vmem:[%s0 + $0x248] sm:$0xff]
  %v97 = vld [vmem:[%s0 + $0x250] sm:$0x33]
  %v98 = vld [vmem:[%s0 + $0x258] sm:$0x33]
  %v107 = vunpack.c.l.b16 %v15
  %v108 = vunpack.c.h.b16 %v15
  %v109 = vunpack.c.l.b16 %v16
  %v110 = vunpack.c.l.b16 %v17
  %v111 = vunpack.c.h.b16 %v17
  %v112 = vunpack.c.l.b16 %v18
  %v113 = vunpack.c.l.b16 %v19
  %v114 = vunpack.c.h.b16 %v19
  %v115 = vunpack.c.l.b16 %v20
  %v116 = vunpack.c.l.b16 %v21
  %v117 = vunpack.c.h.b16 %v21
  %v118 = vunpack.c.l.b16 %v22
  %v119 = vpack.c.b16 %v110, %v107
  %v120 = vpack.c.b16 %v111, %v108
  %v121 = vpack.c.b16 %v112, %v109
  %v122 = vpack.c.b16 %v116, %v113
  %v123 = vpack.c.b16 %v117, %v114
  %v124 = vpack.c.b16 %v118, %v115
  %v205 = vunpack.c.l.b16 %v23
  %v206 = vunpack.c.h.b16 %v23
  %v207 = vunpack.c.l.b16 %v24
  %v208 = vunpack.c.h.b16 %v24
  %v209 = vunpack.c.l.b16 %v25
  %v210 = vunpack.c.h.b16 %v25
  %v211 = vunpack.c.l.b16 %v26
  %v212 = vunpack.c.h.b16 %v26
  %v213 = vunpack.c.l.b16 %v27
  %v214 = vunpack.c.h.b16 %v27
  %v215 = vunpack.c.l.b16 %v28
  %v216 = vunpack.c.h.b16 %v28
  %v217 = vunpack.c.l.b16 %v29
  %v218 = vunpack.c.h.b16 %v29
  %v219 = vunpack.c.l.b16 %v30
  %v220 = vunpack.c.h.b16 %v30
  %v221 = vunpack.c.l.b16 %v31
  %v222 = vunpack.c.h.b16 %v31
  %v223 = vunpack.c.l.b16 %v32
  %v224 = vunpack.c.h.b16 %v32
  %v225 = vunpack.c.l.b16 %v33
  %v226 = vunpack.c.h.b16 %v33
  %v227 = vunpack.c.l.b16 %v34
  %v228 = vunpack.c.h.b16 %v34
  %v229 = vunpack.c.l.b16 %v35
  %v230 = vunpack.c.h.b16 %v35
  %v231 = vunpack.c.l.b16 %v36
  %v232 = vunpack.c.h.b16 %v36
  %v233 = vunpack.c.l.b16 %v37
  %v234 = vunpack.c.h.b16 %v37
  %v235 = vunpack.c.l.b16 %v38
  %v236 = vunpack.c.h.b16 %v38
  %v237 = vunpack.c.l.b16 %v39
  %v238 = vunpack.c.h.b16 %v39
  %v239 = vunpack.c.l.b16 %v40
  %v240 = vunpack.c.h.b16 %v40
  %v241 = vunpack.c.l.b16 %v41
  %v242 = vunpack.c.h.b16 %v41
  %v243 = vunpack.c.l.b16 %v42
  %v244 = vunpack.c.h.b16 %v42
  %v245 = vunpack.c.l.b16 %v43
  %v246 = vunpack.c.h.b16 %v43
  %v247 = vunpack.c.l.b16 %v44
  %v248 = vunpack.c.h.b16 %v44
  %v249 = vunpack.c.l.b16 %v45
  %v250 = vunpack.c.h.b16 %v45
  %v251 = vunpack.c.l.b16 %v46
  %v252 = vunpack.c.h.b16 %v46
  %v253 = vunpack.c.l.b16 %v47
  %v254 = vunpack.c.h.b16 %v47
  %v255 = vunpack.c.l.b16 %v48
  %v256 = vunpack.c.h.b16 %v48
  %v257 = vunpack.c.l.b16 %v49
  %v258 = vunpack.c.h.b16 %v49
  %v259 = vunpack.c.l.b16 %v50
  %v260 = vunpack.c.h.b16 %v50
  %v261 = vunpack.c.l.b16 %v51
  %v262 = vunpack.c.h.b16 %v51
  %v263 = vunpack.c.l.b16 %v52
  %v264 = vunpack.c.h.b16 %v52
  %v265 = vunpack.c.l.b16 %v53
  %v266 = vunpack.c.h.b16 %v53
  %v267 = vunpack.c.l.b16 %v54
  %v268 = vunpack.c.h.b16 %v54
  %v269 = vunpack.c.l.b16 %v55
  %v270 = vunpack.c.h.b16 %v55
  %v271 = vunpack.c.l.b16 %v56
  %v272 = vunpack.c.h.b16 %v56
  %v273 = vunpack.c.l.b16 %v57
  %v274 = vunpack.c.h.b16 %v57
  %v275 = vunpack.c.l.b16 %v58
  %v276 = vunpack.c.h.b16 %v58
  %v277 = vunpack.c.l.b16 %v59
  %v278 = vunpack.c.h.b16 %v59
  %v279 = vunpack.c.l.b16 %v60
  %v280 = vunpack.c.h.b16 %v60
  %v281 = vunpack.c.l.b16 %v61
  %v282 = vunpack.c.h.b16 %v61
  %v283 = vunpack.c.l.b16 %v62
  %v284 = vunpack.c.h.b16 %v62
  %v285 = vunpack.c.l.b16 %v63
  %v286 = vunpack.c.h.b16 %v63
  %v287 = vunpack.c.l.b16 %v64
  %v288 = vunpack.c.h.b16 %v64
  %v289 = vunpack.c.l.b16 %v65
  %v290 = vunpack.c.h.b16 %v65
  %v291 = vunpack.c.l.b16 %v66
  %v292 = vunpack.c.h.b16 %v66
  %v293 = vunpack.c.l.b16 %v67
  %v294 = vunpack.c.h.b16 %v67
  %v295 = vunpack.c.l.b16 %v68
  %v296 = vunpack.c.h.b16 %v68
  %v297 = vunpack.c.l.b16 %v69
  %v298 = vunpack.c.h.b16 %v69
  %v299 = vunpack.c.l.b16 %v70
  %v300 = vunpack.c.h.b16 %v70
  %v301 = vunpack.c.l.b16 %v71
  %v302 = vunpack.c.h.b16 %v71
  %v303 = vunpack.c.l.b16 %v72
  %v304 = vunpack.c.h.b16 %v72
  %v305 = vunpack.c.l.b16 %v73
  %v306 = vunpack.c.h.b16 %v73
  %v307 = vunpack.c.l.b16 %v74
  %v308 = vunpack.c.h.b16 %v74
  %v309 = vunpack.c.l.b16 %v75
  %v310 = vunpack.c.h.b16 %v75
  %v311 = vunpack.c.l.b16 %v76
  %v312 = vunpack.c.h.b16 %v76
  %v313 = vunpack.c.l.b16 %v77
  %v314 = vunpack.c.h.b16 %v77
  %v315 = vunpack.c.l.b16 %v78
  %v316 = vunpack.c.h.b16 %v78
  %v317 = vunpack.c.l.b16 %v79
  %v318 = vunpack.c.h.b16 %v79
  %v319 = vunpack.c.l.b16 %v80
  %v320 = vunpack.c.h.b16 %v80
  %v321 = vunpack.c.l.b16 %v81
  %v322 = vunpack.c.h.b16 %v81
  %v323 = vunpack.c.l.b16 %v82
  %v324 = vunpack.c.h.b16 %v82
  %v325 = vunpack.c.l.b16 %v83
  %v326 = vunpack.c.h.b16 %v83
  %v327 = vunpack.c.l.b16 %v84
  %v328 = vunpack.c.h.b16 %v84
  %v329 = vunpack.c.l.b16 %v85
  %v330 = vunpack.c.h.b16 %v85
  %v331 = vunpack.c.l.b16 %v86
  %v332 = vunpack.c.h.b16 %v86
  %v333 = vunpack.c.l.b16 %v87
  %v334 = vunpack.c.h.b16 %v87
  %v335 = vunpack.c.l.b16 %v88
  %v336 = vunpack.c.h.b16 %v88
  %v337 = vunpack.c.l.b16 %v89
  %v338 = vunpack.c.h.b16 %v89
  %v339 = vunpack.c.l.b16 %v90
  %v340 = vunpack.c.h.b16 %v90
  %v341 = vunpack.c.l.b16 %v91
  %v342 = vunpack.c.h.b16 %v91
  %v343 = vunpack.c.l.b16 %v92
  %v344 = vunpack.c.h.b16 %v92
  %v345 = vunpack.c.l.b16 %v93
  %v346 = vunpack.c.h.b16 %v93
  %v347 = vunpack.c.l.b16 %v94
  %v348 = vunpack.c.h.b16 %v94
  %v349 = vunpack.c.l.b16 %v95
  %v350 = vunpack.c.h.b16 %v95
  %v351 = vunpack.c.l.b16 %v96
  %v352 = vunpack.c.h.b16 %v96
  %v353 = vunpack.c.l.b16 %v97
  %v354 = vunpack.c.h.b16 %v97
  %v355 = vunpack.c.l.b16 %v98
  %v356 = vunpack.c.h.b16 %v98
  %v357 = vpack.c.b16 %v209, %v205
  %v358 = vpack.c.b16 %v210, %v206
  %v359 = vpack.c.b16 %v211, %v207
  %v360 = vpack.c.b16 %v212, %v208
  %v361 = vpack.c.b16 %v217, %v213
  %v362 = vpack.c.b16 %v218, %v214
  %v363 = vpack.c.b16 %v219, %v215
  %v364 = vpack.c.b16 %v220, %v216
  %v365 = vpack.c.b16 %v225, %v221
  %v366 = vpack.c.b16 %v226, %v222
  %v367 = vpack.c.b16 %v227, %v223
  %v368 = vpack.c.b16 %v228, %v224
  %v369 = vpack.c.b16 %v233, %v229
  %v370 = vpack.c.b16 %v234, %v230
  %v371 = vpack.c.b16 %v235, %v231
  %v372 = vpack.c.b16 %v236, %v232
  %v373 = vpack.c.b16 %v241, %v237
  %v374 = vpack.c.b16 %v242, %v238
  %v375 = vpack.c.b16 %v243, %v239
  %v376 = vpack.c.b16 %v244, %v240
  %v377 = vpack.c.b16 %v249, %v245
  %v378 = vpack.c.b16 %v250, %v246
  %v379 = vpack.c.b16 %v251, %v247
  %v380 = vpack.c.b16 %v252, %v248
  %v381 = vpack.c.b16 %v257, %v253
  %v382 = vpack.c.b16 %v258, %v254
  %v383 = vpack.c.b16 %v259, %v255
  %v384 = vpack.c.b16 %v260, %v256
  %v385 = vpack.c.b16 %v265, %v261
  %v386 = vpack.c.b16 %v266, %v262
  %v387 = vpack.c.b16 %v267, %v263
  %v388 = vpack.c.b16 %v268, %v264
  %v389 = vpack.c.b16 %v273, %v269
  %v390 = vpack.c.b16 %v274, %v270
  %v391 = vpack.c.b16 %v275, %v271
  %v392 = vpack.c.b16 %v276, %v272
  %v393 = vpack.c.b16 %v281, %v277
  %v394 = vpack.c.b16 %v282, %v278
  %v395 = vpack.c.b16 %v283, %v279
  %v396 = vpack.c.b16 %v284, %v280
  %v397 = vpack.c.b16 %v289, %v285
  %v398 = vpack.c.b16 %v290, %v286
  %v399 = vpack.c.b16 %v291, %v287
  %v400 = vpack.c.b16 %v292, %v288
  %v401 = vpack.c.b16 %v297, %v293
  %v402 = vpack.c.b16 %v298, %v294
  %v403 = vpack.c.b16 %v299, %v295
  %v404 = vpack.c.b16 %v300, %v296
  %v405 = vpack.c.b16 %v305, %v301
  %v406 = vpack.c.b16 %v306, %v302
  %v407 = vpack.c.b16 %v307, %v303
  %v408 = vpack.c.b16 %v308, %v304
  %v409 = vpack.c.b16 %v313, %v309
  %v410 = vpack.c.b16 %v314, %v310
  %v411 = vpack.c.b16 %v315, %v311
  %v412 = vpack.c.b16 %v316, %v312
  %v413 = vpack.c.b16 %v321, %v317
  %v414 = vpack.c.b16 %v322, %v318
  %v415 = vpack.c.b16 %v323, %v319
  %v416 = vpack.c.b16 %v324, %v320
  %v417 = vpack.c.b16 %v329, %v325
  %v418 = vpack.c.b16 %v330, %v326
  %v419 = vpack.c.b16 %v331, %v327
  %v420 = vpack.c.b16 %v332, %v328
  %v421 = vpack.c.b16 %v337, %v333
  %v422 = vpack.c.b16 %v338, %v334
  %v423 = vpack.c.b16 %v339, %v335
  %v424 = vpack.c.b16 %v340, %v336
  %v425 = vpack.c.b16 %v345, %v341
  %v426 = vpack.c.b16 %v346, %v342
  %v427 = vpack.c.b16 %v347, %v343
  %v428 = vpack.c.b16 %v348, %v344
  %v429 = vpack.c.b16 %v353, %v349
  %v430 = vpack.c.b16 %v354, %v350
  %v431 = vpack.c.b16 %v355, %v351
  %v432 = vpack.c.b16 %v356, %v352
  %vm505 = vcmask 359424
  %v507 = vsel %vm505, %v121, 0
  %v510 = vsel %vm505, %v124, 0
  %vm512 = vcmask 1045504
  %v514 = vsel %vm512, %v429, 0
  %v517 = vsel %vm512, %v430, 0
  %v520 = vsel %vm512, %v431, 0
  %v523 = vsel %vm512, %v432, 0
  %525 = vmatprep.subr.bf16.mxu0 %v358
  %526 = vmatpush1.bf16.msra.mxu0 %v357
  %527 = vmatprep.subr.bf16.mxu0 %v362
  %528 = vmatpush1.bf16.msra.mxu0 %v361
  %529 = vmatprep.subr.bf16.mxu0 %v366
  %530 = vmatpush1.bf16.msra.mxu0 %v365
  %531 = vmatprep.subr.bf16.mxu0 %v370
  %532 = vmatpush1.bf16.msra.mxu0 %v369
  %533 = vmatprep.subr.bf16.mxu0 %v374
  %534 = vmatpush1.bf16.msra.mxu0 %v373
  %535 = vmatprep.subr.bf16.mxu0 %v378
  %536 = vmatpush1.bf16.msra.mxu0 %v377
  %537 = vmatprep.subr.bf16.mxu0 %v382
  %538 = vmatpush1.bf16.msra.mxu0 %v381
  %539 = vmatprep.subr.bf16.mxu0 %v386
  %540 = vmatpush1.bf16.msra.mxu0 %v385
  %541 = vmatprep.subr.bf16.mxu0 %v390
  %542 = vmatpush1.bf16.msra.mxu0 %v389
  %543 = vmatprep.subr.bf16.mxu0 %v394
  %544 = vmatpush1.bf16.msra.mxu0 %v393
  %545 = vmatprep.subr.bf16.mxu0 %v398
  %546 = vmatpush1.bf16.msra.mxu0 %v397
  %547 = vmatprep.subr.bf16.mxu0 %v402
  %548 = vmatpush1.bf16.msra.mxu0 %v401
  %549 = vmatprep.subr.bf16.mxu0 %v406
  %550 = vmatpush1.bf16.msra.mxu0 %v405
  %551 = vmatprep.subr.bf16.mxu0 %v410
  %552 = vmatpush1.bf16.msra.mxu0 %v409
  %553 = vmatprep.subr.bf16.mxu0 %v414
  %554 = vmatpush1.bf16.msra.mxu0 %v413
  %555 = vmatprep.subr.bf16.mxu0 %v418
  %556 = vmatpush1.bf16.msra.mxu0 %v417
  %557 = vmatprep.mubr.bf16.mxu0 %v120
  %558 = vmatmul.mubr.bf16.gmra.mrb[0].mxu0 %v119
  %v559 = vpop.f32.mrb[0].mxu0
  %v560 = vadd.f32 0.0, %v559
  %v561 = vpop.f32.mrb[0].mxu0
  %v562 = vadd.f32 0.0, %v561
  %v563 = vpop.f32.mrb[0].mxu0
  %v564 = vadd.f32 0.0, %v563
  %v565 = vpop.f32.mrb[0].mxu0
  %v566 = vadd.f32 0.0, %v565
  %567 = vmatprep.mubr.bf16.mxu0 %v123
  %568 = vmatmul.mubr.bf16.gmra.mrb[0].mxu0 %v122
  %v569 = vpop.f32.mrb[0].mxu0
  %v570 = vadd.f32 0.0, %v569
  %v571 = vpop.f32.mrb[0].mxu0
  %v572 = vadd.f32 0.0, %v571
  %v573 = vpop.f32.mrb[0].mxu0
  %v574 = vadd.f32 0.0, %v573
  %v575 = vpop.f32.mrb[0].mxu0
  %v576 = vadd.f32 0.0, %v575
  %577 = vdwg.mxu0
  %578 = vmatprep.subr.bf16.mxu0 %v422
  %579 = vmatpush1.bf16.msra.mxu0 %v421
  %580 = vmatprep.subr.bf16.mxu0 %v426
  %581 = vmatpush1.bf16.msra.mxu0 %v425
  %582 = vmatprep.subr.bf16.mxu0 %v517
  %583 = vmatpush1.bf16.msra.mxu0 %v514
  %584 = vmatprep.subr.bf16.mxu0 0
  %585 = vmatpush1.bf16.msra.mxu0 0
  %586 = vmatprep.subr.bf16.mxu0 0
  %587 = vmatpush1.bf16.msra.mxu0 0
  %588 = vmatprep.subr.bf16.mxu0 0
  %589 = vmatpush1.bf16.msra.mxu0 0
  %590 = vmatprep.subr.bf16.mxu0 0
  %591 = vmatpush1.bf16.msra.mxu0 0
  %592 = vmatprep.subr.bf16.mxu0 0
  %593 = vmatpush1.bf16.msra.mxu0 0
  %594 = vmatprep.subr.bf16.mxu0 0
  %595 = vmatpush1.bf16.msra.mxu0 0
  %596 = vmatprep.subr.bf16.mxu0 0
  %597 = vmatpush1.bf16.msra.mxu0 0
  %598 = vmatprep.subr.bf16.mxu0 0
  %599 = vmatpush1.bf16.msra.mxu0 0
  %600 = vmatprep.subr.bf16.mxu0 0
  %601 = vmatpush1.bf16.msra.mxu0 0
  %602 = vmatprep.subr.bf16.mxu0 0
  %603 = vmatpush1.bf16.msra.mxu0 0
  %604 = vmatprep.subr.bf16.mxu0 0
  %605 = vmatpush1.bf16.msra.mxu0 0
  %606 = vmatprep.subr.bf16.mxu0 0
  %607 = vmatpush1.bf16.msra.mxu0 0
  %608 = vmatprep.subr.bf16.mxu0 0
  %609 = vmatpush1.bf16.msra.mxu0 0
  %610 = vmatprep.mubr.bf16.mxu0 0
  %611 = vmatmul.mubr.bf16.gmra.mrb[0].mxu0 %v507
  %v612 = vpop.f32.mrb[0].mxu0
  %v613 = vadd.f32 %v560, %v612
  %v614 = vpop.f32.mrb[0].mxu0
  %v615 = vadd.f32 %v562, %v614
  %v616 = vpop.f32.mrb[0].mxu0
  %v617 = vadd.f32 %v564, %v616
  %v618 = vpop.f32.mrb[0].mxu0
  %v619 = vadd.f32 %v566, %v618
  %620 = vmatprep.mubr.bf16.mxu0 0
  %621 = vmatmul.mubr.bf16.gmra.mrb[0].mxu0 %v510
  %v622 = vpop.f32.mrb[0].mxu0
  %v623 = vadd.f32 %v570, %v622
  %v624 = vpop.f32.mrb[0].mxu0
  %v625 = vadd.f32 %v572, %v624
  %v626 = vpop.f32.mrb[0].mxu0
  %v627 = vadd.f32 %v574, %v626
  %v628 = vpop.f32.mrb[0].mxu0
  %v629 = vadd.f32 %v576, %v628
  %630 = vdwg.mxu0
  %631 = vmatprep.subr.bf16.mxu0 %v360
  %632 = vmatpush1.bf16.msra.mxu0 %v359
  %633 = vmatprep.subr.bf16.mxu0 %v364
  %634 = vmatpush1.bf16.msra.mxu0 %v363
  %635 = vmatprep.subr.bf16.mxu0 %v368
  %636 = vmatpush1.bf16.msra.mxu0 %v367
  %637 = vmatprep.subr.bf16.mxu0 %v372
  %638 = vmatpush1.bf16.msra.mxu0 %v371
  %639 = vmatprep.subr.bf16.mxu0 %v376
  %640 = vmatpush1.bf16.msra.mxu0 %v375
  %641 = vmatprep.subr.bf16.mxu0 %v380
  %642 = vmatpush1.bf16.msra.mxu0 %v379
  %643 = vmatprep.subr.bf16.mxu0 %v384
  %644 = vmatpush1.bf16.msra.mxu0 %v383
  %645 = vmatprep.subr.bf16.mxu0 %v388
  %646 = vmatpush1.bf16.msra.mxu0 %v387
  %647 = vmatprep.subr.bf16.mxu0 %v392
  %648 = vmatpush1.bf16.msra.mxu0 %v391
  %649 = vmatprep.subr.bf16.mxu0 %v396
  %650 = vmatpush1.bf16.msra.mxu0 %v395
  %651 = vmatprep.subr.bf16.mxu0 %v400
  %652 = vmatpush1.bf16.msra.mxu0 %v399
  %653 = vmatprep.subr.bf16.mxu0 %v404
  %654 = vmatpush1.bf16.msra.mxu0 %v403
  %655 = vmatprep.subr.bf16.mxu0 %v408
  %656 = vmatpush1.bf16.msra.mxu0 %v407
  %657 = vmatprep.subr.bf16.mxu0 %v412
  %658 = vmatpush1.bf16.msra.mxu0 %v411
  %659 = vmatprep.subr.bf16.mxu0 %v416
  %660 = vmatpush1.bf16.msra.mxu0 %v415
  %661 = vmatprep.subr.bf16.mxu0 %v420
  %662 = vmatpush1.bf16.msra.mxu0 %v419
  %663 = vmatprep.mubr.bf16.mxu0 %v120
  %664 = vmatmul.mubr.bf16.gmra.mrb[0].mxu0 %v119
  %v665 = vpop.f32.mrb[0].mxu0
  %v666 = vadd.f32 0.0, %v665
  %v667 = vpop.f32.mrb[0].mxu0
  %v668 = vadd.f32 0.0, %v667
  %v669 = vpop.f32.mrb[0].mxu0
  %v670 = vadd.f32 0.0, %v669
  %v671 = vpop.f32.mrb[0].mxu0
  %v672 = vadd.f32 0.0, %v671
  %673 = vmatprep.mubr.bf16.mxu0 %v123
  %674 = vmatmul.mubr.bf16.gmra.mrb[0].mxu0 %v122
  %v675 = vpop.f32.mrb[0].mxu0
  %v676 = vadd.f32 0.0, %v675
  %v677 = vpop.f32.mrb[0].mxu0
  %v678 = vadd.f32 0.0, %v677
  %v679 = vpop.f32.mrb[0].mxu0
  %v680 = vadd.f32 0.0, %v679
  %v681 = vpop.f32.mrb[0].mxu0
  %v682 = vadd.f32 0.0, %v681
  %683 = vdwg.mxu0
  %684 = vmatprep.subr.bf16.mxu0 %v424
  %685 = vmatpush1.bf16.msra.mxu0 %v423
  %686 = vmatprep.subr.bf16.mxu0 %v428
  %687 = vmatpush1.bf16.msra.mxu0 %v427
  %688 = vmatprep.subr.bf16.mxu0 %v523
  %689 = vmatpush1.bf16.msra.mxu0 %v520
  %690 = vmatprep.subr.bf16.mxu0 0
  %691 = vmatpush1.bf16.msra.mxu0 0
  %692 = vmatprep.subr.bf16.mxu0 0
  %693 = vmatpush1.bf16.msra.mxu0 0
  %694 = vmatprep.subr.bf16.mxu0 0
  %695 = vmatpush1.bf16.msra.mxu0 0
  %696 = vmatprep.subr.bf16.mxu0 0
  %697 = vmatpush1.bf16.msra.mxu0 0
  %698 = vmatprep.subr.bf16.mxu0 0
  %699 = vmatpush1.bf16.msra.mxu0 0
  %700 = vmatprep.subr.bf16.mxu0 0
  %701 = vmatpush1.bf16.msra.mxu0 0
  %702 = vmatprep.subr.bf16.mxu0 0
  %703 = vmatpush1.bf16.msra.mxu0 0
  %704 = vmatprep.subr.bf16.mxu0 0
  %705 = vmatpush1.bf16.msra.mxu0 0
  %706 = vmatprep.subr.bf16.mxu0 0
  %707 = vmatpush1.bf16.msra.mxu0 0
  %708 = vmatprep.subr.bf16.mxu0 0
  %709 = vmatpush1.bf16.msra.mxu0 0
  %710 = vmatprep.subr.bf16.mxu0 0
  %711 = vmatpush1.bf16.msra.mxu0 0
  %712 = vmatprep.subr.bf16.mxu0 0
  %713 = vmatpush1.bf16.msra.mxu0 0
  %714 = vmatprep.subr.bf16.mxu0 0
  %715 = vmatpush1.bf16.msra.mxu0 0
  %716 = vmatprep.mubr.bf16.mxu0 0
  %717 = vmatmul.mubr.bf16.gmra.mrb[0].mxu0 %v507
  %v718 = vpop.f32.mrb[0].mxu0
  %v719 = vadd.f32 %v666, %v718
  %v720 = vpop.f32.mrb[0].mxu0
  %v721 = vadd.f32 %v668, %v720
  %v722 = vpop.f32.mrb[0].mxu0
  %v723 = vadd.f32 %v670, %v722
  %v724 = vpop.f32.mrb[0].mxu0
  %v725 = vadd.f32 %v672, %v724
  %726 = vmatprep.mubr.bf16.mxu0 0
  %727 = vmatmul.mubr.bf16.gmra.mrb[0].mxu0 %v510
  %v728 = vpop.f32.mrb[0].mxu0
  %v729 = vadd.f32 %v676, %v728
  %v730 = vpop.f32.mrb[0].mxu0
  %v731 = vadd.f32 %v678, %v730
  %v732 = vpop.f32.mrb[0].mxu0
  %v733 = vadd.f32 %v680, %v732
  %v734 = vpop.f32.mrb[0].mxu0
  %v735 = vadd.f32 %v682, %v734
  %736 = vdwg.mxu0
  %v737 = vmax.f32 %v613, %v617
  %v738 = vmax.f32 %v615, %v619
  %v739 = vmax.f32 %v719, %v723
  %v740 = vmax.f32 %v721, %v725
  %v741 = vmax.f32 %v623, %v627
  %v742 = vmax.f32 %v625, %v629
  %v743 = vmax.f32 %v729, %v733
  %v744 = vmax.f32 %v731, %v735
  %v745 = vmax.f32 %v737, %v741
  %v746 = vmax.f32 %v738, %v742
  %v747 = vmax.f32 %v739, %v743
  %v748 = vmax.f32 %v740, %v744
  %v749 = vld [vmem:[%s2] sm:$0xff]
  %751 = vset.pattern.permute.xlu0 0
  %752 = vperm.xlu0 %751, %v749
  %v753 = vpop.permute.xlu0 %752
  %v755 = vadd.f32 %v745, %v753
  %v756 = vadd.f32 %v746, %v753
  %v757 = vadd.f32 %v747, %v753
  %v758 = vadd.f32 %v748, %v753
  %v759 = vmax.f32 %v755, 0.0
  %v760 = vmax.f32 %v756, 0.0
  %v761 = vmax.f32 %v757, 0.0
  %v762 = vmax.f32 %v758, 0.0
  %v763 = vpack.c.bf16 %v759, %v759
  %v764 = vpack.c.bf16 %v760, %v760
  %v765 = vpack.c.bf16 %v761, %v761
  %v766 = vpack.c.bf16 %v762, %v762
  %v771 = vunpack.c.l.b16 %v763
  %v772 = vunpack.c.l.b16 %v764
  %v773 = vunpack.c.l.b16 %v765
  %v774 = vunpack.c.l.b16 %v766
  %v775 = vpack.c.b16 %v772, %v771
  %v776 = vpack.c.b16 %v774, %v773
  %779 = vst [vmem:[%s3] sm:$0xff] %v775
  %780 = vst [vmem:[%s3 + $0x8] sm:$0xff] %v776
  // Predicated region
  $region14: #{convnet_forward.3} parent=0 // pred_check
    _
  $region15: #{convnet_forward.3} parent=0 // pred_check_branch
    %782 = sbr.rel (0) target = $region17
  $region16: #{convnet_forward.3} parent=0 // pred_region
    _
  $region17: #{convnet_forward.3} parent=0 // pred_fallthru
    _
  // Predicated region
  $region18: #{convnet_forward.3} parent=0 // pred_check
    _
  $region19: #{convnet_forward.3} parent=0 // pred_check_branch
    %784 = sbr.rel (0) target = $region21
  $region20: #{convnet_forward.3} parent=0 // pred_region
    _
  $region21: #{convnet_forward.3} parent=0 // pred_fallthru
    _

// kernel: convnet_forward.4
$region0: #{convnet_forward.4}
  #allocation0 [shape = 'u32[]', space=smem, size = 0x4, offset = 0x4, fixed_abs, tag = 'smem constant byte address 0x4 - core index']
  #allocation1 [shape = 'u32[144,128]{1,0:T(1,128)}', space=vmem, size = 0x12000, scoped, tag = 'internal scratch']
  %s0 = inlined_call_operand.vmem [shape: bf16[600,128], index: 0, kind: input, shape index: {}]
  %s1 = inlined_call_operand.vmem [shape: bf16[64,600], index: 1, kind: input, shape index: {}]
  %s2 = inlined_call_operand.vmem [shape: f32[16,1], index: 2, kind: input, shape index: {}]
  %s3 = inlined_call_operand.vmem [shape: bf16[16,128], index: 3, kind: output, shape index: {}]
  %s4 = sld [smem:[#allocation0]]
  $region22: #{convnet_forward.4} parent=0
    _
  %s6 = ssub.s32 1, %s4
  %s7 = scalar_select 0, %s6, %s4
  // Predicated region
  $region2: #{convnet_forward.4} parent=0 // pred_check
    _
  $region3: #{convnet_forward.4} parent=0 // pred_check_branch
    %9 = sbr.rel (0) target = $region5
  $region4: #{convnet_forward.4} parent=0 // pred_region
    _
  $region5: #{convnet_forward.4} parent=0 // pred_fallthru
    _
  // Predicated region
  $region6: #{convnet_forward.4} parent=0 // pred_check
    _
  $region7: #{convnet_forward.4} parent=0 // pred_check_branch
    %11 = sbr.rel (0) target = $region9
  $region8: #{convnet_forward.4} parent=0 // pred_region
    _
  $region9: #{convnet_forward.4} parent=0 // pred_fallthru
    _
  // Predicated region
  $region10: #{convnet_forward.4} parent=0 // pred_check
    _
  $region11: #{convnet_forward.4} parent=0 // pred_check_branch
    %13 = sbr.rel (0) target = $region13
  $region12: #{convnet_forward.4} parent=0 // pred_region
    _
  $region13: #{convnet_forward.4} parent=0 // pred_fallthru
    _
  %v15 = vld [vmem:[%s1] sm:$0xff]
  %v16 = vld [vmem:[%s1 + $0x8] sm:$0xff]
  %v17 = vld [vmem:[%s1 + $0x10] sm:$0xf]
  %v18 = vld [vmem:[%s1 + $0x14] sm:$0xff]
  %v19 = vld [vmem:[%s1 + $0x1c] sm:$0xff]
  %v20 = vld [vmem:[%s1 + $0x24] sm:$0xf]
  %v21 = vld [vmem:[%s1 + $0x28] sm:$0xff]
  %v22 = vld [vmem:[%s1 + $0x30] sm:$0xff]
  %v23 = vld [vmem:[%s1 + $0x38] sm:$0xf]
  %v24 = vld [vmem:[%s1 + $0x3c] sm:$0xff]
  %v25 = vld [vmem:[%s1 + $0x44] sm:$0xff]
  %v26 = vld [vmem:[%s1 + $0x4c] sm:$0xf]
  %v27 = vld [vmem:[%s1 + $0x50] sm:$0xff]
  %v28 = vld [vmem:[%s1 + $0x58] sm:$0xff]
  %v29 = vld [vmem:[%s1 + $0x60] sm:$0xf]
  %v30 = vld [vmem:[%s1 + $0x64] sm:$0xff]
  %v31 = vld [vmem:[%s1 + $0x6c] sm:$0xff]
  %v32 = vld [vmem:[%s1 + $0x74] sm:$0xf]
  %v33 = vld [vmem:[%s1 + $0x78] sm:$0xff]
  %v34 = vld [vmem:[%s1 + $0x80] sm:$0xff]
  %v35 = vld [vmem:[%s1 + $0x88] sm:$0xf]
  %v36 = vld [vmem:[%s1 + $0x8c] sm:$0xff]
  %v37 = vld [vmem:[%s1 + $0x94] sm:$0xff]
  %v38 = vld [vmem:[%s1 + $0x9c] sm:$0xf]
  %v39 = vld [vmem:[%s0] sm:$0xf]
  %v40 = vld [vmem:[%s0 + $0x4] sm:$0xf]
  %v41 = vld [vmem:[%s0 + $0x8] sm:$0xf]
  %v42 = vld [vmem:[%s0 + $0xc] sm:$0xf]
  %v43 = vld [vmem:[%s0 + $0x10] sm:$0xf]
  %v44 = vld [vmem:[%s0 + $0x14] sm:$0xf]
  %v45 = vld [vmem:[%s0 + $0x18] sm:$0xf]
  %v46 = vld [vmem:[%s0 + $0x1c] sm:$0xf]
  %v47 = vld [vmem:[%s0 + $0x20] sm:$0xf]
  %v48 = vld [vmem:[%s0 + $0x24] sm:$0xf]
  %v49 = vld [vmem:[%s0 + $0x28] sm:$0xf]
  %v50 = vld [vmem:[%s0 + $0x2c] sm:$0xf]
  %v51 = vld [vmem:[%s0 + $0x30] sm:$0xf]
  %v52 = vld [vmem:[%s0 + $0x34] sm:$0xf]
  %v53 = vld [vmem:[%s0 + $0x38] sm:$0xf]
  %v54 = vld [vmem:[%s0 + $0x3c] sm:$0xf]
  %v55 = vld [vmem:[%s0 + $0x40] sm:$0xf]
  %v56 = vld [vmem:[%s0 + $0x44] sm:$0xf]
  %v57 = vld [vmem:[%s0 + $0x48] sm:$0xf]
  %v58 = vld [vmem:[%s0 + $0x4c] sm:$0xf]
  %v59 = vld [vmem:[%s0 + $0x50] sm:$0xf]
  %v60 = vld [vmem:[%s0 + $0x54] sm:$0xf]
  %v61 = vld [vmem:[%s0 + $0x58] sm:$0xf]
  %v62 = vld [vmem:[%s0 + $0x5c] sm:$0xf]
  %v63 = vld [vmem:[%s0 + $0x60] sm:$0xf]
  %v64 = vld [vmem:[%s0 + $0x64] sm:$0xf]
  %v65 = vld [vmem:[%s0 + $0x68] sm:$0xf]
  %v66 = vld [vmem:[%s0 + $0x6c] sm:$0xf]
  %v67 = vld [vmem:[%s0 + $0x70] sm:$0xf]
  %v68 = vld [vmem:[%s0 + $0x74] sm:$0xf]
  %v69 = vld [vmem:[%s0 + $0x78] sm:$0xf]
  %v70 = vld [vmem:[%s0 + $0x7c] sm:$0xf]
  %v71 = vld [vmem:[%s0 + $0x80] sm:$0xf]
  %v72 = vld [vmem:[%s0 + $0x84] sm:$0xf]
  %v73 = vld [vmem:[%s0 + $0x88] sm:$0xf]
  %v74 = vld [vmem:[%s0 + $0x8c] sm:$0xf]
  %v75 = vld [vmem:[%s0 + $0x90] sm:$0xf]
  %v76 = vld [vmem:[%s0 + $0x94] sm:$0xf]
  %v77 = vld [vmem:[%s0 + $0x98] sm:$0xf]
  %v78 = vld [vmem:[%s0 + $0x9c] sm:$0xf]
  %v79 = vld [vmem:[%s0 + $0xa0] sm:$0xf]
  %v80 = vld [vmem:[%s0 + $0xa4] sm:$0xf]
  %v81 = vld [vmem:[%s0 + $0xa8] sm:$0xf]
  %v82 = vld [vmem:[%s0 + $0xac] sm:$0xf]
  %v83 = vld [vmem:[%s0 + $0xb0] sm:$0xf]
  %v84 = vld [vmem:[%s0 + $0xb4] sm:$0xf]
  %v85 = vld [vmem:[%s0 + $0xb8] sm:$0xf]
  %v86 = vld [vmem:[%s0 + $0xbc] sm:$0xf]
  %v87 = vld [vmem:[%s0 + $0xc0] sm:$0xf]
  %v88 = vld [vmem:[%s0 + $0xc4] sm:$0xf]
  %v89 = vld [vmem:[%s0 + $0xc8] sm:$0xf]
  %v90 = vld [vmem:[%s0 + $0xcc] sm:$0xf]
  %v91 = vld [vmem:[%s0 + $0xd0] sm:$0xf]
  %v92 = vld [vmem:[%s0 + $0xd4] sm:$0xf]
  %v93 = vld [vmem:[%s0 + $0xd8] sm:$0xf]
  %v94 = vld [vmem:[%s0 + $0xdc] sm:$0xf]
  %v95 = vld [vmem:[%s0 + $0xe0] sm:$0xf]
  %v96 = vld [vmem:[%s0 + $0xe4] sm:$0xf]
  %v97 = vld [vmem:[%s0 + $0xe8] sm:$0xf]
  %v98 = vld [vmem:[%s0 + $0xec] sm:$0xf]
  %v99 = vld [vmem:[%s0 + $0xf0] sm:$0xf]
  %v100 = vld [vmem:[%s0 + $0xf4] sm:$0xf]
  %v101 = vld [vmem:[%s0 + $0xf8] sm:$0xf]
  %v102 = vld [vmem:[%s0 + $0xfc] sm:$0xf]
  %v103 = vld [vmem:[%s0 + $0x100] sm:$0xf]
  %v104 = vld [vmem:[%s0 + $0x104] sm:$0xf]
  %v105 = vld [vmem:[%s0 + $0x108] sm:$0xf]
  %v106 = vld [vmem:[%s0 + $0x10c] sm:$0xf]
  %v107 = vld [vmem:[%s0 + $0x110] sm:$0xf]
  %v108 = vld [vmem:[%s0 + $0x114] sm:$0xf]
  %v109 = vld [vmem:[%s0 + $0x118] sm:$0xf]
  %v110 = vld [vmem:[%s0 + $0x11c] sm:$0xf]
  %v111 = vld [vmem:[%s0 + $0x120] sm:$0xf]
  %v112 = vld [vmem:[%s0 + $0x124] sm:$0xf]
  %v113 = vld [vmem:[%s0 + $0x128] sm:$0xf]
  %v138 = vunpack.c.l.b16 %v15
  %v139 = vunpack.c.h.b16 %v15
  %v140 = vunpack.c.l.b16 %v16
  %v141 = vunpack.c.h.b16 %v16
  %v142 = vunpack.c.l.b16 %v17
  %v143 = vunpack.c.l.b16 %v18
  %v144 = vunpack.c.h.b16 %v18
  %v145 = vunpack.c.l.b16 %v19
  %v146 = vunpack.c.h.b16 %v19
  %v147 = vunpack.c.l.b16 %v20
  %v148 = vunpack.c.l.b16 %v21
  %v149 = vunpack.c.h.b16 %v21
  %v150 = vunpack.c.l.b16 %v22
  %v151 = vunpack.c.h.b16 %v22
  %v152 = vunpack.c.l.b16 %v23
  %v153 = vunpack.c.l.b16 %v24
  %v154 = vunpack.c.h.b16 %v24
  %v155 = vunpack.c.l.b16 %v25
  %v156 = vunpack.c.h.b16 %v25
  %v157 = vunpack.c.l.b16 %v26
  %v158 = vunpack.c.l.b16 %v27
  %v159 = vunpack.c.h.b16 %v27
  %v160 = vunpack.c.l.b16 %v28
  %v161 = vunpack.c.h.b16 %v28
  %v162 = vunpack.c.l.b16 %v29
  %v163 = vunpack.c.l.b16 %v30
  %v164 = vunpack.c.h.b16 %v30
  %v165 = vunpack.c.l.b16 %v31
  %v166 = vunpack.c.h.b16 %v31
  %v167 = vunpack.c.l.b16 %v32
  %v168 = vunpack.c.l.b16 %v33
  %v169 = vunpack.c.h.b16 %v33
  %v170 = vunpack.c.l.b16 %v34
  %v171 = vunpack.c.h.b16 %v34
  %v172 = vunpack.c.l.b16 %v35
  %v173 = vunpack.c.l.b16 %v36
  %v174 = vunpack.c.h.b16 %v36
  %v175 = vunpack.c.l.b16 %v37
  %v176 = vunpack.c.h.b16 %v37
  %v177 = vunpack.c.l.b16 %v38
  %v178 = vpack.c.b16 %v143, %v138
  %v179 = vpack.c.b16 %v144, %v139
  %v180 = vpack.c.b16 %v145, %v140
  %v181 = vpack.c.b16 %v146, %v141
  %v182 = vpack.c.b16 %v147, %v142
  %v183 = vpack.c.b16 %v153, %v148
  %v184 = vpack.c.b16 %v154, %v149
  %v185 = vpack.c.b16 %v155, %v150
  %v186 = vpack.c.b16 %v156, %v151
  %v187 = vpack.c.b16 %v157, %v152
  %v188 = vpack.c.b16 %v163, %v158
  %v189 = vpack.c.b16 %v164, %v159
  %v190 = vpack.c.b16 %v165, %v160
  %v191 = vpack.c.b16 %v166, %v161
  %v192 = vpack.c.b16 %v167, %v162
  %v193 = vpack.c.b16 %v173, %v168
  %v194 = vpack.c.b16 %v174, %v169
  %v195 = vpack.c.b16 %v175, %v170
  %v196 = vpack.c.b16 %v176, %v171
  %v197 = vpack.c.b16 %v177, %v172
  %v289 = vunpack.c.l.b16 %v39
  %v290 = vunpack.c.l.b16 %v40
  %v291 = vunpack.c.l.b16 %v41
  %v292 = vunpack.c.l.b16 %v42
  %v293 = vunpack.c.l.b16 %v43
  %v294 = vunpack.c.l.b16 %v44
  %v295 = vunpack.c.l.b16 %v45
  %v296 = vunpack.c.l.b16 %v46
  %v297 = vunpack.c.l.b16 %v47
  %v298 = vunpack.c.l.b16 %v48
  %v299 = vunpack.c.l.b16 %v49
  %v300 = vunpack.c.l.b16 %v50
  %v301 = vunpack.c.l.b16 %v51
  %v302 = vunpack.c.l.b16 %v52
  %v303 = vunpack.c.l.b16 %v53
  %v304 = vunpack.c.l.b16 %v54
  %v305 = vunpack.c.l.b16 %v55
  %v306 = vunpack.c.l.b16 %v56
  %v307 = vunpack.c.l.b16 %v57
  %v308 = vunpack.c.l.b16 %v58
  %v309 = vunpack.c.l.b16 %v59
  %v310 = vunpack.c.l.b16 %v60
  %v311 = vunpack.c.l.b16 %v61
  %v312 = vunpack.c.l.b16 %v62
  %v313 = vunpack.c.l.b16 %v63
  %v314 = vunpack.c.l.b16 %v64
  %v315 = vunpack.c.l.b16 %v65
  %v316 = vunpack.c.l.b16 %v66
  %v317 = vunpack.c.l.b16 %v67
  %v318 = vunpack.c.l.b16 %v68
  %v319 = vunpack.c.l.b16 %v69
  %v320 = vunpack.c.l.b16 %v70
  %v321 = vunpack.c.l.b16 %v71
  %v322 = vunpack.c.l.b16 %v72
  %v323 = vunpack.c.l.b16 %v73
  %v324 = vunpack.c.l.b16 %v74
  %v325 = vunpack.c.l.b16 %v75
  %v326 = vunpack.c.l.b16 %v76
  %v327 = vunpack.c.l.b16 %v77
  %v328 = vunpack.c.l.b16 %v78
  %v329 = vunpack.c.l.b16 %v79
  %v330 = vunpack.c.l.b16 %v80
  %v331 = vunpack.c.l.b16 %v81
  %v332 = vunpack.c.l.b16 %v82
  %v333 = vunpack.c.l.b16 %v83
  %v334 = vunpack.c.l.b16 %v84
  %v335 = vunpack.c.l.b16 %v85
  %v336 = vunpack.c.l.b16 %v86
  %v337 = vunpack.c.l.b16 %v87
  %v338 = vunpack.c.l.b16 %v88
  %v339 = vunpack.c.l.b16 %v89
  %v340 = vunpack.c.l.b16 %v90
  %v341 = vunpack.c.l.b16 %v91
  %v342 = vunpack.c.l.b16 %v92
  %v343 = vunpack.c.l.b16 %v93
  %v344 = vunpack.c.l.b16 %v94
  %v345 = vunpack.c.l.b16 %v95
  %v346 = vunpack.c.l.b16 %v96
  %v347 = vunpack.c.l.b16 %v97
  %v348 = vunpack.c.l.b16 %v98
  %v349 = vunpack.c.l.b16 %v99
  %v350 = vunpack.c.l.b16 %v100
  %v351 = vunpack.c.l.b16 %v101
  %v352 = vunpack.c.l.b16 %v102
  %v353 = vunpack.c.l.b16 %v103
  %v354 = vunpack.c.l.b16 %v104
  %v355 = vunpack.c.l.b16 %v105
  %v356 = vunpack.c.l.b16 %v106
  %v357 = vunpack.c.l.b16 %v107
  %v358 = vunpack.c.l.b16 %v108
  %v359 = vunpack.c.l.b16 %v109
  %v360 = vunpack.c.l.b16 %v110
  %v361 = vunpack.c.l.b16 %v111
  %v362 = vunpack.c.l.b16 %v112
  %v363 = vunpack.c.l.b16 %v113
  %v364 = vpack.c.b16 %v290, %v289
  %v365 = vpack.c.b16 %v292, %v291
  %v366 = vpack.c.b16 %v294, %v293
  %v367 = vpack.c.b16 %v296, %v295
  %v368 = vpack.c.b16 %v298, %v297
  %v369 = vpack.c.b16 %v300, %v299
  %v370 = vpack.c.b16 %v302, %v301
  %v371 = vpack.c.b16 %v304, %v303
  %v372 = vpack.c.b16 %v306, %v305
  %v373 = vpack.c.b16 %v308, %v307
  %v374 = vpack.c.b16 %v310, %v309
  %v375 = vpack.c.b16 %v312, %v311
  %v376 = vpack.c.b16 %v314, %v313
  %v377 = vpack.c.b16 %v316, %v315
  %v378 = vpack.c.b16 %v318, %v317
  %v379 = vpack.c.b16 %v320, %v319
  %v380 = vpack.c.b16 %v322, %v321
  %v381 = vpack.c.b16 %v324, %v323
  %v382 = vpack.c.b16 %v326, %v325
  %v383 = vpack.c.b16 %v328, %v327
  %v384 = vpack.c.b16 %v330, %v329
  %v385 = vpack.c.b16 %v332, %v331
  %v386 = vpack.c.b16 %v334, %v333
  %v387 = vpack.c.b16 %v336, %v335
  %v388 = vpack.c.b16 %v338, %v337
  %v389 = vpack.c.b16 %v340, %v339
  %v390 = vpack.c.b16 %v342, %v341
  %v391 = vpack.c.b16 %v344, %v343
  %v392 = vpack.c.b16 %v346, %v345
  %v393 = vpack.c.b16 %v348, %v347
  %v394 = vpack.c.b16 %v350, %v349
  %v395 = vpack.c.b16 %v352, %v351
  %v396 = vpack.c.b16 %v354, %v353
  %v397 = vpack.c.b16 %v356, %v355
  %v398 = vpack.c.b16 %v358, %v357
  %v399 = vpack.c.b16 %v360, %v359
  %v400 = vpack.c.b16 %v362, %v361
  %v401 = vpack.c.b16 %v363, %v363
  %vm439 = vcmask 719872
  %v441 = vsel %vm439, %v182, 0
  %v444 = vsel %vm439, %v187, 0
  %v447 = vsel %vm439, %v192, 0
  %v450 = vsel %vm439, %v197, 0
  %vm452 = vcmask 1043456
  %v454 = vsel %vm452, %v401, 0
  %456 = vmatprep.subr.bf16.mxu0 0
  %457 = vmatpush1.bf16.msra.mxu0 %v364
  %458 = vmatprep.subr.bf16.mxu0 0
  %459 = vmatpush1.bf16.msra.mxu0 %v365
  %460 = vmatprep.subr.bf16.mxu0 0
  %461 = vmatpush1.bf16.msra.mxu0 %v366
  %462 = vmatprep.subr.bf16.mxu0 0
  %463 = vmatpush1.bf16.msra.mxu0 %v367
  %464 = vmatprep.subr.bf16.mxu0 0
  %465 = vmatpush1.bf16.msra.mxu0 %v368
  %466 = vmatprep.subr.bf16.mxu0 0
  %467 = vmatpush1.bf16.msra.mxu0 %v369
  %468 = vmatprep.subr.bf16.mxu0 0
  %469 = vmatpush1.bf16.msra.mxu0 %v370
  %470 = vmatprep.subr.bf16.mxu0 0
  %471 = vmatpush1.bf16.msra.mxu0 %v371
  %472 = vmatprep.subr.bf16.mxu0 0
  %473 = vmatpush1.bf16.msra.mxu0 %v372
  %474 = vmatprep.subr.bf16.mxu0 0
  %475 = vmatpush1.bf16.msra.mxu0 %v373
  %476 = vmatprep.subr.bf16.mxu0 0
  %477 = vmatpush1.bf16.msra.mxu0 %v374
  %478 = vmatprep.subr.bf16.mxu0 0
  %479 = vmatpush1.bf16.msra.mxu0 %v375
  %480 = vmatprep.subr.bf16.mxu0 0
  %481 = vmatpush1.bf16.msra.mxu0 %v376
  %482 = vmatprep.subr.bf16.mxu0 0
  %483 = vmatpush1.bf16.msra.mxu0 %v377
  %484 = vmatprep.subr.bf16.mxu0 0
  %485 = vmatpush1.bf16.msra.mxu0 %v378
  %486 = vmatprep.subr.bf16.mxu0 0
  %487 = vmatpush1.bf16.msra.mxu0 %v379
  %488 = vmatprep.mubr.bf16.mxu0 %v179
  %489 = vmatmul.mubr.bf16.gmra.mrb[0].mxu0 %v178
  %v490 = vpop.f32.mrb[0].mxu0
  %v491 = vadd.f32 0.0, %v490
  %v492 = vpop.f32.mrb[0].mxu0
  %v493 = vpop.f32.mrb[0].mxu0
  %v494 = vadd.f32 0.0, %v493
  %v495 = vpop.f32.mrb[0].mxu0
  %496 = vmatprep.mubr.bf16.mxu0 %v184
  %497 = vmatmul.mubr.bf16.gmra.mrb[0].mxu0 %v183
  %v498 = vpop.f32.mrb[0].mxu0
  %v499 = vadd.f32 0.0, %v498
  %v500 = vpop.f32.mrb[0].mxu0
  %v501 = vpop.f32.mrb[0].mxu0
  %v502 = vadd.f32 0.0, %v501
  %v503 = vpop.f32.mrb[0].mxu0
  %504 = vmatprep.mubr.bf16.mxu0 %v189
  %505 = vmatmul.mubr.bf16.gmra.mrb[0].mxu0 %v188
  %v506 = vpop.f32.mrb[0].mxu0
  %v507 = vadd.f32 0.0, %v506
  %v508 = vpop.f32.mrb[0].mxu0
  %v509 = vpop.f32.mrb[0].mxu0
  %v510 = vadd.f32 0.0, %v509
  %v511 = vpop.f32.mrb[0].mxu0
  %512 = vmatprep.mubr.bf16.mxu0 %v194
  %513 = vmatmul.mubr.bf16.gmra.mrb[0].mxu0 %v193
  %v514 = vpop.f32.mrb[0].mxu0
  %v515 = vadd.f32 0.0, %v514
  %v516 = vpop.f32.mrb[0].mxu0
  %v517 = vpop.f32.mrb[0].mxu0
  %v518 = vadd.f32 0.0, %v517
  %v519 = vpop.f32.mrb[0].mxu0
  %520 = vdwg.mxu0
  %521 = vmatprep.subr.bf16.mxu0 0
  %522 = vmatpush1.bf16.msra.mxu0 %v380
  %523 = vmatprep.subr.bf16.mxu0 0
  %524 = vmatpush1.bf16.msra.mxu0 %v381
  %525 = vmatprep.subr.bf16.mxu0 0
  %526 = vmatpush1.bf16.msra.mxu0 %v382
  %527 = vmatprep.subr.bf16.mxu0 0
  %528 = vmatpush1.bf16.msra.mxu0 %v383
  %529 = vmatprep.subr.bf16.mxu0 0
  %530 = vmatpush1.bf16.msra.mxu0 %v384
  %531 = vmatprep.subr.bf16.mxu0 0
  %532 = vmatpush1.bf16.msra.mxu0 %v385
  %533 = vmatprep.subr.bf16.mxu0 0
  %534 = vmatpush1.bf16.msra.mxu0 %v386
  %535 = vmatprep.subr.bf16.mxu0 0
  %536 = vmatpush1.bf16.msra.mxu0 %v387
  %537 = vmatprep.subr.bf16.mxu0 0
  %538 = vmatpush1.bf16.msra.mxu0 %v388
  %539 = vmatprep.subr.bf16.mxu0 0
  %540 = vmatpush1.bf16.msra.mxu0 %v389
  %541 = vmatprep.subr.bf16.mxu0 0
  %542 = vmatpush1.bf16.msra.mxu0 %v390
  %543 = vmatprep.subr.bf16.mxu0 0
  %544 = vmatpush1.bf16.msra.mxu0 %v391
  %545 = vmatprep.subr.bf16.mxu0 0
  %546 = vmatpush1.bf16.msra.mxu0 %v392
  %547 = vmatprep.subr.bf16.mxu0 0
  %548 = vmatpush1.bf16.msra.mxu0 %v393
  %549 = vmatprep.subr.bf16.mxu0 0
  %550 = vmatpush1.bf16.msra.mxu0 %v394
  %551 = vmatprep.subr.bf16.mxu0 0
  %552 = vmatpush1.bf16.msra.mxu0 %v395
  %553 = vmatprep.mubr.bf16.mxu0 %v181
  %554 = vmatmul.mubr.bf16.gmra.mrb[0].mxu0 %v180
  %v555 = vpop.f32.mrb[0].mxu0
  %v556 = vadd.f32 %v491, %v555
  %v557 = vpop.f32.mrb[0].mxu0
  %v558 = vpop.f32.mrb[0].mxu0
  %v559 = vadd.f32 %v494, %v558
  %v560 = vpop.f32.mrb[0].mxu0
  %561 = vmatprep.mubr.bf16.mxu0 %v186
  %562 = vmatmul.mubr.bf16.gmra.mrb[0].mxu0 %v185
  %v563 = vpop.f32.mrb[0].mxu0
  %v564 = vadd.f32 %v499, %v563
  %v565 = vpop.f32.mrb[0].mxu0
  %v566 = vpop.f32.mrb[0].mxu0
  %v567 = vadd.f32 %v502, %v566
  %v568 = vpop.f32.mrb[0].mxu0
  %569 = vmatprep.mubr.bf16.mxu0 %v191
  %570 = vmatmul.mubr.bf16.gmra.mrb[0].mxu0 %v190
  %v571 = vpop.f32.mrb[0].mxu0
  %v572 = vadd.f32 %v507, %v571
  %v573 = vpop.f32.mrb[0].mxu0
  %v574 = vpop.f32.mrb[0].mxu0
  %v575 = vadd.f32 %v510, %v574
  %v576 = vpop.f32.mrb[0].mxu0
  %577 = vmatprep.mubr.bf16.mxu0 %v196
  %578 = vmatmul.mubr.bf16.gmra.mrb[0].mxu0 %v195
  %v579 = vpop.f32.mrb[0].mxu0
  %v580 = vadd.f32 %v515, %v579
  %v581 = vpop.f32.mrb[0].mxu0
  %v582 = vpop.f32.mrb[0].mxu0
  %v583 = vadd.f32 %v518, %v582
  %v584 = vpop.f32.mrb[0].mxu0
  %585 = vdwg.mxu0
  %586 = vmatprep.subr.bf16.mxu0 0
  %587 = vmatpush1.bf16.msra.mxu0 %v396
  %588 = vmatprep.subr.bf16.mxu0 0
  %589 = vmatpush1.bf16.msra.mxu0 %v397
  %590 = vmatprep.subr.bf16.mxu0 0
  %591 = vmatpush1.bf16.msra.mxu0 %v398
  %592 = vmatprep.subr.bf16.mxu0 0
  %593 = vmatpush1.bf16.msra.mxu0 %v399
  %594 = vmatprep.subr.bf16.mxu0 0
  %595 = vmatpush1.bf16.msra.mxu0 %v400
  %596 = vmatprep.subr.bf16.mxu0 0
  %597 = vmatpush1.bf16.msra.mxu0 %v454
  %598 = vmatprep.subr.bf16.mxu0 0
  %599 = vmatpush1.bf16.msra.mxu0 0
  %600 = vmatprep.subr.bf16.mxu0 0
  %601 = vmatpush1.bf16.msra.mxu0 0
  %602 = vmatprep.subr.bf16.mxu0 0
  %603 = vmatpush1.bf16.msra.mxu0 0
  %604 = vmatprep.subr.bf16.mxu0 0
  %605 = vmatpush1.bf16.msra.mxu0 0
  %606 = vmatprep.subr.bf16.mxu0 0
  %607 = vmatpush1.bf16.msra.mxu0 0
  %608 = vmatprep.subr.bf16.mxu0 0
  %609 = vmatpush1.bf16.msra.mxu0 0
  %610 = vmatprep.subr.bf16.mxu0 0
  %611 = vmatpush1.bf16.msra.mxu0 0
  %612 = vmatprep.subr.bf16.mxu0 0
  %613 = vmatpush1.bf16.msra.mxu0 0
  %614 = vmatprep.subr.bf16.mxu0 0
  %615 = vmatpush1.bf16.msra.mxu0 0
  %616 = vmatprep.subr.bf16.mxu0 0
  %617 = vmatpush1.bf16.msra.mxu0 0
  %618 = vmatprep.mubr.bf16.mxu0 0
  %619 = vmatmul.mubr.bf16.gmra.mrb[0].mxu0 %v441
  %v620 = vpop.f32.mrb[0].mxu0
  %v621 = vadd.f32 %v556, %v620
  %v622 = vpop.f32.mrb[0].mxu0
  %v623 = vpop.f32.mrb[0].mxu0
  %v624 = vadd.f32 %v559, %v623
  %v625 = vpop.f32.mrb[0].mxu0
  %626 = vmatprep.mubr.bf16.mxu0 0
  %627 = vmatmul.mubr.bf16.gmra.mrb[0].mxu0 %v444
  %v628 = vpop.f32.mrb[0].mxu0
  %v629 = vadd.f32 %v564, %v628
  %v630 = vpop.f32.mrb[0].mxu0
  %v631 = vpop.f32.mrb[0].mxu0
  %v632 = vadd.f32 %v567, %v631
  %v633 = vpop.f32.mrb[0].mxu0
  %634 = vmatprep.mubr.bf16.mxu0 0
  %635 = vmatmul.mubr.bf16.gmra.mrb[0].mxu0 %v447
  %v636 = vpop.f32.mrb[0].mxu0
  %v637 = vadd.f32 %v572, %v636
  %v638 = vpop.f32.mrb[0].mxu0
  %v639 = vpop.f32.mrb[0].mxu0
  %v640 = vadd.f32 %v575, %v639
  %v641 = vpop.f32.mrb[0].mxu0
  %642 = vmatprep.mubr.bf16.mxu0 0
  %643 = vmatmul.mubr.bf16.gmra.mrb[0].mxu0 %v450
  %v644 = vpop.f32.mrb[0].mxu0
  %v645 = vadd.f32 %v580, %v644
  %v646 = vpop.f32.mrb[0].mxu0
  %v647 = vpop.f32.mrb[0].mxu0
  %v648 = vadd.f32 %v583, %v647
  %v649 = vpop.f32.mrb[0].mxu0
  %650 = vdwg.mxu0
  %v651 = vmax.f32 %v621, %v629
  %v652 = vmax.f32 %v624, %v632
  %v653 = vmax.f32 %v637, %v645
  %v654 = vmax.f32 %v640, %v648
  %v655 = vmax.f32 %v651, %v653
  %v656 = vmax.f32 %v652, %v654
  %v657 = vld [vmem:[%s2] sm:$0xff]
  %v658 = vld [vmem:[%s2 + $0x8] sm:$0xff]
  %660 = vset.pattern.permute.xlu0 0
  %661 = vperm.xlu0 %660, %v657
  %v662 = vpop.permute.xlu0 %661
  %665 = vset.pattern.permute.xlu0 0
  %666 = vperm.xlu0 %665, %v658
  %v667 = vpop.permute.xlu0 %666
  %v669 = vadd.f32 %v655, %v662
  %v670 = vadd.f32 %v656, %v667
  %v671 = vmax.f32 %v669, 0.0
  %v672 = vmax.f32 %v670, 0.0
  %v673 = vpack.c.bf16 %v672, %v671
  %v675 = vunpack.c.l.b16 %v673
  %v676 = vunpack.c.h.b16 %v673
  %v677 = vpack.c.b16 %v675, %v675
  %v678 = vpack.c.b16 %v676, %v676
  %681 = vst [vmem:[%s3] sm:$0xf] %v677
  %682 = vst [vmem:[%s3 + $0x4] sm:$0xf] %v678
  // Predicated region
  $region14: #{convnet_forward.4} parent=0 // pred_check
    _
  $region15: #{convnet_forward.4} parent=0 // pred_check_branch
    %684 = sbr.rel (0) target = $region17
  $region16: #{convnet_forward.4} parent=0 // pred_region
    _
  $region17: #{convnet_forward.4} parent=0 // pred_fallthru
    _
  // Predicated region
  $region18: #{convnet_forward.4} parent=0 // pred_check
    _
  $region19: #{convnet_forward.4} parent=0 // pred_check_branch
    %686 = sbr.rel (0) target = $region21
  $region20: #{convnet_forward.4} parent=0 // pred_region
    _
  $region21: #{convnet_forward.4} parent=0 // pred_fallthru
    _

// kernel: convnet_forward.5
$region0: #{convnet_forward.5}
  #allocation0 [shape = 'u32[]', space=smem, size = 0x4, offset = 0x4, fixed_abs, tag = 'smem constant byte address 0x4 - core index']
  #allocation1 [shape = 'u32[144,128]{1,0:T(1,128)}', space=vmem, size = 0x12000, scoped, tag = 'internal scratch']
  %s0 = inlined_call_operand.vmem [shape: bf16[8,400], index: 0, kind: input, shape index: {}]
  %s1 = inlined_call_operand.vmem [shape: bf16[400,128], index: 1, kind: input, shape index: {}]
  %s2 = inlined_call_operand.vmem [shape: f32[1,128], index: 2, kind: input, shape index: {}]
  %s3 = inlined_call_operand.vmem [shape: bf16[128,128], index: 3, kind: input, shape index: {}]
  %s4 = inlined_call_operand.vmem [shape: f32[1,128], index: 4, kind: input, shape index: {}]
  %s5 = inlined_call_operand.vmem [shape: bf16[128,128], index: 5, kind: input, shape index: {}]
  %s6 = inlined_call_operand.vmem [shape: f32[1,128], index: 6, kind: input, shape index: {}]
  %s7 = inlined_call_operand.vmem [shape: f32[8,128], index: 7, kind: output, shape index: {}]
  %s8 = sld [smem:[#allocation0]]
  $region38: #{convnet_forward.5} parent=0
    _
  %s10 = ssub.s32 1, %s8
  %s11 = scalar_select 0, %s10, %s8
  // Predicated region
  $region2: #{convnet_forward.5} parent=0 // pred_check
    _
  $region3: #{convnet_forward.5} parent=0 // pred_check_branch
    %13 = sbr.rel (0) target = $region5
  $region4: #{convnet_forward.5} parent=0 // pred_region
    _
  $region5: #{convnet_forward.5} parent=0 // pred_fallthru
    _
  // Predicated region
  $region6: #{convnet_forward.5} parent=0 // pred_check
    _
  $region7: #{convnet_forward.5} parent=0 // pred_check_branch
    %15 = sbr.rel (0) target = $region9
  $region8: #{convnet_forward.5} parent=0 // pred_region
    _
  $region9: #{convnet_forward.5} parent=0 // pred_fallthru
    _
  // Predicated region
  $region10: #{convnet_forward.5} parent=0 // pred_check
    _
  $region11: #{convnet_forward.5} parent=0 // pred_check_branch
    %17 = sbr.rel (0) target = $region13
  $region12: #{convnet_forward.5} parent=0 // pred_region
    _
  $region13: #{convnet_forward.5} parent=0 // pred_fallthru
    _
  // Predicated region
  $region14: #{convnet_forward.5} parent=0 // pred_check
    _
  $region15: #{convnet_forward.5} parent=0 // pred_check_branch
    %19 = sbr.rel (0) target = $region17
  $region16: #{convnet_forward.5} parent=0 // pred_region
    _
  $region17: #{convnet_forward.5} parent=0 // pred_fallthru
    _
  // Predicated region
  $region18: #{convnet_forward.5} parent=0 // pred_check
    _
  $region19: #{convnet_forward.5} parent=0 // pred_check_branch
    %21 = sbr.rel (0) target = $region21
  $region20: #{convnet_forward.5} parent=0 // pred_region
    _
  $region21: #{convnet_forward.5} parent=0 // pred_fallthru
    _
  // Predicated region
  $region22: #{convnet_forward.5} parent=0 // pred_check
    _
  $region23: #{convnet_forward.5} parent=0 // pred_check_branch
    %23 = sbr.rel (0) target = $region25
  $region24: #{convnet_forward.5} parent=0 // pred_region
    _
  $region25: #{convnet_forward.5} parent=0 // pred_fallthru
    _
  // Predicated region
  $region26: #{convnet_forward.5} parent=0 // pred_check
    _
  $region27: #{convnet_forward.5} parent=0 // pred_check_branch
    %25 = sbr.rel (0) target = $region29
  $region28: #{convnet_forward.5} parent=0 // pred_region
    _
  $region29: #{convnet_forward.5} parent=0 // pred_fallthru
    _
  %v27 = vld [vmem:[%s0] sm:$0xff]
  %v28 = vld [vmem:[%s0 + $0x8] sm:$0xff]
  %v29 = vld [vmem:[%s1] sm:$0xf]
  %v30 = vld [vmem:[%s1 + $0x4] sm:$0xf]
  %v31 = vld [vmem:[%s1 + $0x8] sm:$0xf]
  %v32 = vld [vmem:[%s1 + $0xc] sm:$0xf]
  %v33 = vld [vmem:[%s1 + $0x10] sm:$0xf]
  %v34 = vld [vmem:[%s1 + $0x14] sm:$0xf]
  %v35 = vld [vmem:[%s1 + $0x18] sm:$0xf]
  %v36 = vld [vmem:[%s1 + $0x1c] sm:$0xf]
  %v37 = vld [vmem:[%s1 + $0x20] sm:$0xf]
  %v38 = vld [vmem:[%s1 + $0x24] sm:$0xf]
  %v39 = vld [vmem:[%s1 + $0x28] sm:$0xf]
  %v40 = vld [vmem:[%s1 + $0x2c] sm:$0xf]
  %v41 = vld [vmem:[%s1 + $0x30] sm:$0xf]
  %v42 = vld [vmem:[%s1 + $0x34] sm:$0xf]
  %v43 = vld [vmem:[%s1 + $0x38] sm:$0xf]
  %v44 = vld [vmem:[%s1 + $0x3c] sm:$0xf]
  %v45 = vld [vmem:[%s1 + $0x40] sm:$0xf]
  %v46 = vld [vmem:[%s1 + $0x44] sm:$0xf]
  %v47 = vld [vmem:[%s1 + $0x48] sm:$0xf]
  %v48 = vld [vmem:[%s1 + $0x4c] sm:$0xf]
  %v49 = vld [vmem:[%s1 + $0x50] sm:$0xf]
  %v50 = vld [vmem:[%s1 + $0x54] sm:$0xf]
  %v51 = vld [vmem:[%s1 + $0x58] sm:$0xf]
  %v52 = vld [vmem:[%s1 + $0x5c] sm:$0xf]
  %v53 = vld [vmem:[%s1 + $0x60] sm:$0xf]
  %v54 = vld [vmem:[%s1 + $0x64] sm:$0xf]
  %v55 = vld [vmem:[%s1 + $0x68] sm:$0xf]
  %v56 = vld [vmem:[%s1 + $0x6c] sm:$0xf]
  %v57 = vld [vmem:[%s1 + $0x70] sm:$0xf]
  %v58 = vld [vmem:[%s1 + $0x74] sm:$0xf]
  %v59 = vld [vmem:[%s1 + $0x78] sm:$0xf]
  %v60 = vld [vmem:[%s1 + $0x7c] sm:$0xf]
  %v61 = vld [vmem:[%s1 + $0x80] sm:$0xf]
  %v62 = vld [vmem:[%s1 + $0x84] sm:$0xf]
  %v63 = vld [vmem:[%s1 + $0x88] sm:$0xf]
  %v64 = vld [vmem:[%s1 + $0x8c] sm:$0xf]
  %v65 = vld [vmem:[%s1 + $0x90] sm:$0xf]
  %v66 = vld [vmem:[%s1 + $0x94] sm:$0xf]
  %v67 = vld [vmem:[%s1 + $0x98] sm:$0xf]
  %v68 = vld [vmem:[%s1 + $0x9c] sm:$0xf]
  %v69 = vld [vmem:[%s1 + $0xa0] sm:$0xf]
  %v70 = vld [vmem:[%s1 + $0xa4] sm:$0xf]
  %v71 = vld [vmem:[%s1 + $0xa8] sm:$0xf]
  %v72 = vld [vmem:[%s1 + $0xac] sm:$0xf]
  %v73 = vld [vmem:[%s1 + $0xb0] sm:$0xf]
  %v74 = vld [vmem:[%s1 + $0xb4] sm:$0xf]
  %v75 = vld [vmem:[%s1 + $0xb8] sm:$0xf]
  %v76 = vld [vmem:[%s1 + $0xbc] sm:$0xf]
  %v77 = vld [vmem:[%s1 + $0xc0] sm:$0xf]
  %v78 = vld [vmem:[%s1 + $0xc4] sm:$0xf]
  %v79 = vld [vmem:[%s2] sm:$0x1]
  %v81 = vlaneseq
  %v82 = vshrl.u32 %v81, 7
  %v83 = vsub.s32 0, %v82
  %v84 = vrot.slane %v79, %v83
  %v88 = vunpack.c.l.b16 %v27
  %v89 = vunpack.c.h.b16 %v27
  %v90 = vunpack.c.l.b16 %v28
  %v91 = vunpack.c.h.b16 %v28
  %v92 = vpack.c.b16 %v88, %v88
  %v93 = vpack.c.b16 %v89, %v89
  %v94 = vpack.c.b16 %v90, %v90
  %v95 = vpack.c.b16 %v91, %v91
  %v149 = vunpack.c.l.b16 %v29
  %v150 = vunpack.c.l.b16 %v30
  %v151 = vunpack.c.l.b16 %v31
  %v152 = vunpack.c.l.b16 %v32
  %v153 = vunpack.c.l.b16 %v33
  %v154 = vunpack.c.l.b16 %v34
  %v155 = vunpack.c.l.b16 %v35
  %v156 = vunpack.c.l.b16 %v36
  %v157 = vunpack.c.l.b16 %v37
  %v158 = vunpack.c.l.b16 %v38
  %v159 = vunpack.c.l.b16 %v39
  %v160 = vunpack.c.l.b16 %v40
  %v161 = vunpack.c.l.b16 %v41
  %v162 = vunpack.c.l.b16 %v42
  %v163 = vunpack.c.l.b16 %v43
  %v164 = vunpack.c.l.b16 %v44
  %v165 = vunpack.c.l.b16 %v45
  %v166 = vunpack.c.l.b16 %v46
  %v167 = vunpack.c.l.b16 %v47
  %v168 = vunpack.c.l.b16 %v48
  %v169 = vunpack.c.l.b16 %v49
  %v170 = vunpack.c.l.b16 %v50
  %v171 = vunpack.c.l.b16 %v51
  %v172 = vunpack.c.l.b16 %v52
  %v173 = vunpack.c.l.b16 %v53
  %v174 = vunpack.c.l.b16 %v54
  %v175 = vunpack.c.l.b16 %v55
  %v176 = vunpack.c.l.b16 %v56
  %v177 = vunpack.c.l.b16 %v57
  %v178 = vunpack.c.l.b16 %v58
  %v179 = vunpack.c.l.b16 %v59
  %v180 = vunpack.c.l.b16 %v60
  %v181 = vunpack.c.l.b16 %v61
  %v182 = vunpack.c.l.b16 %v62
  %v183 = vunpack.c.l.b16 %v63
  %v184 = vunpack.c.l.b16 %v64
  %v185 = vunpack.c.l.b16 %v65
  %v186 = vunpack.c.l.b16 %v66
  %v187 = vunpack.c.l.b16 %v67
  %v188 = vunpack.c.l.b16 %v68
  %v189 = vunpack.c.l.b16 %v69
  %v190 = vunpack.c.l.b16 %v70
  %v191 = vunpack.c.l.b16 %v71
  %v192 = vunpack.c.l.b16 %v72
  %v193 = vunpack.c.l.b16 %v73
  %v194 = vunpack.c.l.b16 %v74
  %v195 = vunpack.c.l.b16 %v75
  %v196 = vunpack.c.l.b16 %v76
  %v197 = vunpack.c.l.b16 %v77
  %v198 = vunpack.c.l.b16 %v78
  %v199 = vpack.c.b16 %v150, %v149
  %v200 = vpack.c.b16 %v152, %v151
  %v201 = vpack.c.b16 %v154, %v153
  %v202 = vpack.c.b16 %v156, %v155
  %v203 = vpack.c.b16 %v158, %v157
  %v204 = vpack.c.b16 %v160, %v159
  %v205 = vpack.c.b16 %v162, %v161
  %v206 = vpack.c.b16 %v164, %v163
  %v207 = vpack.c.b16 %v166, %v165
  %v208 = vpack.c.b16 %v168, %v167
  %v209 = vpack.c.b16 %v170, %v169
  %v210 = vpack.c.b16 %v172, %v171
  %v211 = vpack.c.b16 %v174, %v173
  %v212 = vpack.c.b16 %v176, %v175
  %v213 = vpack.c.b16 %v178, %v177
  %v214 = vpack.c.b16 %v180, %v179
  %v215 = vpack.c.b16 %v182, %v181
  %v216 = vpack.c.b16 %v184, %v183
  %v217 = vpack.c.b16 %v186, %v185
  %v218 = vpack.c.b16 %v188, %v187
  %v219 = vpack.c.b16 %v190, %v189
  %v220 = vpack.c.b16 %v192, %v191
  %v221 = vpack.c.b16 %v194, %v193
  %v222 = vpack.c.b16 %v196, %v195
  %v223 = vpack.c.b16 %v198, %v197
  %vm249 = vcmask 130048
  %v251 = vsel %vm249, %v95, 0
  %253 = vmatprep.subr.bf16.mxu0 0
  %254 = vmatpush1.bf16.msra.mxu0 %v199
  %255 = vmatprep.subr.bf16.mxu0 0
  %256 = vmatpush1.bf16.msra.mxu0 %v200
  %257 = vmatprep.subr.bf16.mxu0 0
  %258 = vmatpush1.bf16.msra.mxu0 %v201
  %259 = vmatprep.subr.bf16.mxu0 0
  %260 = vmatpush1.bf16.msra.mxu0 %v202
  %261 = vmatprep.subr.bf16.mxu0 0
  %262 = vmatpush1.bf16.msra.mxu0 %v203
  %263 = vmatprep.subr.bf16.mxu0 0
  %264 = vmatpush1.bf16.msra.mxu0 %v204
  %265 = vmatprep.subr.bf16.mxu0 0
  %266 = vmatpush1.bf16.msra.mxu0 %v205
  %267 = vmatprep.subr.bf16.mxu0 0
  %268 = vmatpush1.bf16.msra.mxu0 %v206
  %269 = vmatprep.subr.bf16.mxu0 0
  %270 = vmatpush1.bf16.msra.mxu0 %v207
  %271 = vmatprep.subr.bf16.mxu0 0
  %272 = vmatpush1.bf16.msra.mxu0 %v208
  %273 = vmatprep.subr.bf16.mxu0 0
  %274 = vmatpush1.bf16.msra.mxu0 %v209
  %275 = vmatprep.subr.bf16.mxu0 0
  %276 = vmatpush1.bf16.msra.mxu0 %v210
  %277 = vmatprep.subr.bf16.mxu0 0
  %278 = vmatpush1.bf16.msra.mxu0 %v211
  %279 = vmatprep.subr.bf16.mxu0 0
  %280 = vmatpush1.bf16.msra.mxu0 %v212
  %281 = vmatprep.subr.bf16.mxu0 0
  %282 = vmatpush1.bf16.msra.mxu0 %v213
  %283 = vmatprep.subr.bf16.mxu0 0
  %284 = vmatpush1.bf16.msra.mxu0 %v214
  %285 = vmatprep.mubr.bf16.mxu0 %v93
  %286 = vmatmul.mubr.bf16.gmra.mrb[0].mxu0 %v92
  %v287 = vpop.f32.mrb[0].mxu0
  %v288 = vadd.f32 %v84, %v287
  %v289 = vpop.f32.mrb[0].mxu0
  %v290 = vpop.f32.mrb[0].mxu0
  %v291 = vpop.f32.mrb[0].mxu0
  %292 = vdwg.mxu0
  %293 = vmatprep.subr.bf16.mxu0 0
  %294 = vmatpush1.bf16.msra.mxu0 %v215
  %295 = vmatprep.subr.bf16.mxu0 0
  %296 = vmatpush1.bf16.msra.mxu0 %v216
  %297 = vmatprep.subr.bf16.mxu0 0
  %298 = vmatpush1.bf16.msra.mxu0 %v217
  %299 = vmatprep.subr.bf16.mxu0 0
  %300 = vmatpush1.bf16.msra.mxu0 %v218
  %301 = vmatprep.subr.bf16.mxu0 0
  %302 = vmatpush1.bf16.msra.mxu0 %v219
  %303 = vmatprep.subr.bf16.mxu0 0
  %304 = vmatpush1.bf16.msra.mxu0 %v220
  %305 = vmatprep.subr.bf16.mxu0 0
  %306 = vmatpush1.bf16.msra.mxu0 %v221
  %307 = vmatprep.subr.bf16.mxu0 0
  %308 = vmatpush1.bf16.msra.mxu0 %v222
  %309 = vmatprep.subr.bf16.mxu0 0
  %310 = vmatpush1.bf16.msra.mxu0 %v223
  %311 = vmatprep.subr.bf16.mxu0 0
  %312 = vmatpush1.bf16.msra.mxu0 0
  %313 = vmatprep.subr.bf16.mxu0 0
  %314 = vmatpush1.bf16.msra.mxu0 0
  %315 = vmatprep.subr.bf16.mxu0 0
  %316 = vmatpush1.bf16.msra.mxu0 0
  %317 = vmatprep.subr.bf16.mxu0 0
  %318 = vmatpush1.bf16.msra.mxu0 0
  %319 = vmatprep.subr.bf16.mxu0 0
  %320 = vmatpush1.bf16.msra.mxu0 0
  %321 = vmatprep.subr.bf16.mxu0 0
  %322 = vmatpush1.bf16.msra.mxu0 0
  %323 = vmatprep.subr.bf16.mxu0 0
  %324 = vmatpush1.bf16.msra.mxu0 0
  %325 = vmatprep.mubr.bf16.mxu0 %v251
  %326 = vmatmul.mubr.bf16.gmra.mrb[0].mxu0 %v94
  %v327 = vpop.f32.mrb[0].mxu0
  %v328 = vadd.f32 %v288, %v327
  %v329 = vpop.f32.mrb[0].mxu0
  %v330 = vpop.f32.mrb[0].mxu0
  %v331 = vpop.f32.mrb[0].mxu0
  %332 = vdwg.mxu0
  %v333 = vmax.f32 %v328, 0.0
  %v334 = vpack.c.bf16 %v333, %v333
  %v335 = vld [vmem:[%s3] sm:$0xf]
  %v336 = vld [vmem:[%s3 + $0x4] sm:$0xf]
  %v337 = vld [vmem:[%s3 + $0x8] sm:$0xf]
  %v338 = vld [vmem:[%s3 + $0xc] sm:$0xf]
  %v339 = vld [vmem:[%s3 + $0x10] sm:$0xf]
  %v340 = vld [vmem:[%s3 + $0x14] sm:$0xf]
  %v341 = vld [vmem:[%s3 + $0x18] sm:$0xf]
  %v342 = vld [vmem:[%s3 + $0x1c] sm:$0xf]
  %v343 = vld [vmem:[%s3 + $0x20] sm:$0xf]
  %v344 = vld [vmem:[%s3 + $0x24] sm:$0xf]
  %v345 = vld [vmem:[%s3 + $0x28] sm:$0xf]
  %v346 = vld [vmem:[%s3 + $0x2c] sm:$0xf]
  %v347 = vld [vmem:[%s3 + $0x30] sm:$0xf]
  %v348 = vld [vmem:[%s3 + $0x34] sm:$0xf]
  %v349 = vld [vmem:[%s3 + $0x38] sm:$0xf]
  %v350 = vld [vmem:[%s3 + $0x3c] sm:$0xf]
  %v351 = vld [vmem:[%s4] sm:$0x1]
  %v353 = vlaneseq
  %v354 = vshrl.u32 %v353, 7
  %v355 = vsub.s32 0, %v354
  %v356 = vrot.slane %v351, %v355
  %v374 = vunpack.c.l.b16 %v335
  %v375 = vunpack.c.l.b16 %v336
  %v376 = vunpack.c.l.b16 %v337
  %v377 = vunpack.c.l.b16 %v338
  %v378 = vunpack.c.l.b16 %v339
  %v379 = vunpack.c.l.b16 %v340
  %v380 = vunpack.c.l.b16 %v341
  %v381 = vunpack.c.l.b16 %v342
  %v382 = vunpack.c.l.b16 %v343
  %v383 = vunpack.c.l.b16 %v344
  %v384 = vunpack.c.l.b16 %v345
  %v385 = vunpack.c.l.b16 %v346
  %v386 = vunpack.c.l.b16 %v347
  %v387 = vunpack.c.l.b16 %v348
  %v388 = vunpack.c.l.b16 %v349
  %v389 = vunpack.c.l.b16 %v350
  %v390 = vpack.c.b16 %v375, %v374
  %v391 = vpack.c.b16 %v377, %v376
  %v392 = vpack.c.b16 %v379, %v378
  %v393 = vpack.c.b16 %v381, %v380
  %v394 = vpack.c.b16 %v383, %v382
  %v395 = vpack.c.b16 %v385, %v384
  %v396 = vpack.c.b16 %v387, %v386
  %v397 = vpack.c.b16 %v389, %v388
  %406 = vmatprep.subr.bf16.mxu0 0
  %407 = vmatpush1.bf16.msra.mxu0 %v390
  %408 = vmatprep.subr.bf16.mxu0 0
  %409 = vmatpush1.bf16.msra.mxu0 %v391
  %410 = vmatprep.subr.bf16.mxu0 0
  %411 = vmatpush1.bf16.msra.mxu0 %v392
  %412 = vmatprep.subr.bf16.mxu0 0
  %413 = vmatpush1.bf16.msra.mxu0 %v393
  %414 = vmatprep.subr.bf16.mxu0 0
  %415 = vmatpush1.bf16.msra.mxu0 %v394
  %416 = vmatprep.subr.bf16.mxu0 0
  %417 = vmatpush1.bf16.msra.mxu0 %v395
  %418 = vmatprep.subr.bf16.mxu0 0
  %419 = vmatpush1.bf16.msra.mxu0 %v396
  %420 = vmatprep.subr.bf16.mxu0 0
  %421 = vmatpush1.bf16.msra.mxu0 %v397
  %422 = vmatprep.subr.bf16.mxu0 0
  %423 = vmatpush1.bf16.msra.mxu0 0
  %424 = vmatprep.subr.bf16.mxu0 0
  %425 = vmatpush1.bf16.msra.mxu0 0
  %426 = vmatprep.subr.bf16.mxu0 0
  %427 = vmatpush1.bf16.msra.mxu0 0
  %428 = vmatprep.subr.bf16.mxu0 0
  %429 = vmatpush1.bf16.msra.mxu0 0
  %430 = vmatprep.subr.bf16.mxu0 0
  %431 = vmatpush1.bf16.msra.mxu0 0
  %432 = vmatprep.subr.bf16.mxu0 0
  %433 = vmatpush1.bf16.msra.mxu0 0
  %434 = vmatprep.subr.bf16.mxu0 0
  %435 = vmatpush1.bf16.msra.mxu0 0
  %436 = vmatprep.subr.bf16.mxu0 0
  %437 = vmatpush1.bf16.msra.mxu0 0
  %438 = vmatprep.mubr.bf16.mxu0 0
  %439 = vmatmul.mubr.bf16.gmra.mrb[0].mxu0 %v334
  %v440 = vpop.f32.mrb[0].mxu0
  %v441 = vadd.f32 %v356, %v440
  %v442 = vpop.f32.mrb[0].mxu0
  %v443 = vpop.f32.mrb[0].mxu0
  %v444 = vpop.f32.mrb[0].mxu0
  %445 = vdwg.mxu0
  %v446 = vmax.f32 %v441, 0.0
  %v447 = vpack.c.bf16 %v446, %v446
  %v448 = vld [vmem:[%s5] sm:$0xf]
  %v449 = vld [vmem:[%s5 + $0x4] sm:$0xf]
  %v450 = vld [vmem:[%s5 + $0x8] sm:$0xf]
  %v451 = vld [vmem:[%s5 + $0xc] sm:$0xf]
  %v452 = vld [vmem:[%s5 + $0x10] sm:$0xf]
  %v453 = vld [vmem:[%s5 + $0x14] sm:$0xf]
  %v454 = vld [vmem:[%s5 + $0x18] sm:$0xf]
  %v455 = vld [vmem:[%s5 + $0x1c] sm:$0xf]
  %v456 = vld [vmem:[%s5 + $0x20] sm:$0xf]
  %v457 = vld [vmem:[%s5 + $0x24] sm:$0xf]
  %v458 = vld [vmem:[%s5 + $0x28] sm:$0xf]
  %v459 = vld [vmem:[%s5 + $0x2c] sm:$0xf]
  %v460 = vld [vmem:[%s5 + $0x30] sm:$0xf]
  %v461 = vld [vmem:[%s5 + $0x34] sm:$0xf]
  %v462 = vld [vmem:[%s5 + $0x38] sm:$0xf]
  %v463 = vld [vmem:[%s5 + $0x3c] sm:$0xf]
  %v464 = vld [vmem:[%s6] sm:$0x1]
  %v466 = vlaneseq
  %v467 = vshrl.u32 %v466, 7
  %v468 = vsub.s32 0, %v467
  %v469 = vrot.slane %v464, %v468
  %v487 = vunpack.c.l.b16 %v448
  %v488 = vunpack.c.l.b16 %v449
  %v489 = vunpack.c.l.b16 %v450
  %v490 = vunpack.c.l.b16 %v451
  %v491 = vunpack.c.l.b16 %v452
  %v492 = vunpack.c.l.b16 %v453
  %v493 = vunpack.c.l.b16 %v454
  %v494 = vunpack.c.l.b16 %v455
  %v495 = vunpack.c.l.b16 %v456
  %v496 = vunpack.c.l.b16 %v457
  %v497 = vunpack.c.l.b16 %v458
  %v498 = vunpack.c.l.b16 %v459
  %v499 = vunpack.c.l.b16 %v460
  %v500 = vunpack.c.l.b16 %v461
  %v501 = vunpack.c.l.b16 %v462
  %v502 = vunpack.c.l.b16 %v463
  %v503 = vpack.c.b16 %v488, %v487
  %v504 = vpack.c.b16 %v490, %v489
  %v505 = vpack.c.b16 %v492, %v491
  %v506 = vpack.c.b16 %v494, %v493
  %v507 = vpack.c.b16 %v496, %v495
  %v508 = vpack.c.b16 %v498, %v497
  %v509 = vpack.c.b16 %v500, %v499
  %v510 = vpack.c.b16 %v502, %v501
  %519 = vmatprep.subr.bf16.mxu0 0
  %520 = vmatpush1.bf16.msra.mxu0 %v503
  %521 = vmatprep.subr.bf16.mxu0 0
  %522 = vmatpush1.bf16.msra.mxu0 %v504
  %523 = vmatprep.subr.bf16.mxu0 0
  %524 = vmatpush1.bf16.msra.mxu0 %v505
  %525 = vmatprep.subr.bf16.mxu0 0
  %526 = vmatpush1.bf16.msra.mxu0 %v506
  %527 = vmatprep.subr.bf16.mxu0 0
  %528 = vmatpush1.bf16.msra.mxu0 %v507
  %529 = vmatprep.subr.bf16.mxu0 0
  %530 = vmatpush1.bf16.msra.mxu0 %v508
  %531 = vmatprep.subr.bf16.mxu0 0
  %532 = vmatpush1.bf16.msra.mxu0 %v509
  %533 = vmatprep.subr.bf16.mxu0 0
  %534 = vmatpush1.bf16.msra.mxu0 %v510
  %535 = vmatprep.subr.bf16.mxu0 0
  %536 = vmatpush1.bf16.msra.mxu0 0
  %537 = vmatprep.subr.bf16.mxu0 0
  %538 = vmatpush1.bf16.msra.mxu0 0
  %539 = vmatprep.subr.bf16.mxu0 0
  %540 = vmatpush1.bf16.msra.mxu0 0
  %541 = vmatprep.subr.bf16.mxu0 0
  %542 = vmatpush1.bf16.msra.mxu0 0
  %543 = vmatprep.subr.bf16.mxu0 0
  %544 = vmatpush1.bf16.msra.mxu0 0
  %545 = vmatprep.subr.bf16.mxu0 0
  %546 = vmatpush1.bf16.msra.mxu0 0
  %547 = vmatprep.subr.bf16.mxu0 0
  %548 = vmatpush1.bf16.msra.mxu0 0
  %549 = vmatprep.subr.bf16.mxu0 0
  %550 = vmatpush1.bf16.msra.mxu0 0
  %551 = vmatprep.mubr.bf16.mxu0 0
  %552 = vmatmul.mubr.bf16.gmra.mrb[0].mxu0 %v447
  %v553 = vpop.f32.mrb[0].mxu0
  %v554 = vadd.f32 %v469, %v553
  %v555 = vpop.f32.mrb[0].mxu0
  %v556 = vpop.f32.mrb[0].mxu0
  %v557 = vpop.f32.mrb[0].mxu0
  %558 = vdwg.mxu0
  %559 = vst [vmem:[%s7] sm:$0xff] %v554
  // Predicated region
  $region30: #{convnet_forward.5} parent=0 // pred_check
    _
  $region31: #{convnet_forward.5} parent=0 // pred_check_branch
    %561 = sbr.rel (0) target = $region33
  $region32: #{convnet_forward.5} parent=0 // pred_region
    _
  $region33: #{convnet_forward.5} parent=0 // pred_fallthru
    _
  // Predicated region
  $region34: #{convnet_forward.5} parent=0 // pred_check
    _
  $region35: #{convnet_forward.5} parent=0 // pred_check_branch
    %563 = sbr.rel (0) target = $region37
  $region36: #{convnet_forward.5} parent=0 // pred_region
    _
  $region37: #{convnet_forward.5} parent=0 // pred_fallthru
    _

</llo_original>
